<compile_context>
chip_gen: v7x
topology: tpu7x:2x2x1
jax: 0.10.0
libtpu: 0.0.40
codegen_flags: <defaults>
</compile_context>

<pallas_src>
import math

import jax
import jax.numpy as jnp
from jax.experimental import pallas as pl
from jax.experimental.pallas import tpu as pltpu

LOG2PI = math.log(2.0 * math.pi)


# ----------------------------- fused kernel ----------------------------------
def _make_kernel(C, S, Nn, T, K, KS, dil, Bblk, MPAD):
    NT = T * Nn                      # lanes per source s (t-major, n-minor)
    Nf = S * NT                      # GMRE feature axis
    T_out = T - dil * (KS - 1)
    M = T_out * Nn                   # conv output lanes per batch element
    OC = S * C                       # conv output channels
    R = Bblk * C                     # GMRE rows handled per grid step
    CT = 2 * C * S * KS              # fused conv contraction ({norm,x} halves x taps x C)
    PADW = MPAD - M                  # spare lanes; loss stats live in the first two
    inv_Nf = 1.0 / Nf

    def kernel(xk_ref, w3_ref, b3_ref, wfg_ref, bfg_ref, wsr_ref, bsr_ref, out_ref):
        h = xk_ref[0]                                              # (R, Nf) f32

        # ---------------- GMRE: fused alpha/sigma/mu 1x1 convs (one matmul) ----
        r = jnp.dot(h, w3_ref[...], preferred_element_type=jnp.float32) + b3_ref[...]
        ra = r[:, 0:K]                # mixture logits
        rs = r[:, K:2 * K]            # log sigma
        rm = r[:, 2 * K:3 * K]        # mu

        # stable (log-)softmax over the K mixture components
        rmax = jnp.max(ra, axis=-1, keepdims=True)
        ex = jnp.exp(ra - rmax)
        ssum = jnp.sum(ex, axis=-1, keepdims=True)
        log_alphas = (ra - rmax) - jnp.log(ssum)                   # (R, K)
        alphas = ex * pl.reciprocal(ssum)                          # (R, K)

        # ------------- mixture loop A: log-pdfs, running max, argmax select ----
        lcp, lp = [], []
        mmax = best = sel_sig = None
        for k in range(K):
            mu_k = rm[:, k:k + 1]                                  # (R, 1)
            ls_k = rs[:, k:k + 1]                                  # log sigma_k
            sig_k = jnp.exp(ls_k)
            z = (h - mu_k) * jnp.exp(-ls_k)
            lcp_k = -ls_k - 0.5 * LOG2PI - 0.5 * z * z             # (R, Nf)
            lp_k = lcp_k + log_alphas[:, k:k + 1]
            lcp.append(lcp_k)
            lp.append(lp_k)
            if k == 0:
                mmax, best, sel_sig = lp_k, lp_k, sig_k
            else:
                mmax = jnp.maximum(mmax, lp_k)
                take = lp_k > best                                 # first-max tie-break
                best = jnp.where(take, lp_k, best)
                sel_sig = jnp.where(take, sig_k, sel_sig)          # sigma[argmax]

        # cluster_norm: the PyTorch code aliases new_mu/new_sigma/labels (same
        # tensor), so both collapse to sigma[argmax cluster].
        # TODO(synk): assumes no exact-float collision of a written sigma value
        # with a later integer cluster id (would perturb the torch masking loop).
        norm = (h - sel_sig) / (sel_sig + 1e-05)                   # (R, Nf)

        # ------------- mixture loop B: stable responsibilities + loss partials --
        sump = fi_un = None
        for k in range(K):
            p_k = jnp.exp(lp[k] - mmax)
            c_k = p_k * lcp[k]
            sump = p_k if k == 0 else sump + p_k
            fi_un = c_k if k == 0 else fi_un + c_k
        inv_sump = pl.reciprocal(sump)
        lse = mmax + jnp.log(sump)                                 # log_sum (R, Nf)
        # first_item partial: sum over (Nf, K) of gamma_k * log_component_prob_k
        fi_row = jnp.sum(fi_un * inv_sump, axis=-1, keepdims=True)   # (R, 1)
        # q_z is torch's mean-of-logs over Nf: mean(lp_k - lse) = mean(lp_k) - mean(lse)
        mean_lse = jnp.sum(lse, axis=-1, keepdims=True) * inv_Nf     # (R, 1)
        kl_row = None
        for k in range(K):
            q_zk = jnp.sum(lp[k], axis=-1, keepdims=True) * inv_Nf - mean_lse
            t_k = alphas[:, k:k + 1] * (log_alphas[:, k:k + 1] - q_zk)
            kl_row = t_k if k == 0 else kl_row + t_k               # (R, 1)

        # -------- gated dilated Conv3d: ONE matmul over all taps & halves -------
        # lane order is (s, t, n): each tap (s, kt) is a contiguous M-lane slice,
        # so the (CT, Bblk*M) im2col RHS is just a concat of slices (no gathers).
        rhs_rows = []
        for s in range(S):
            for kt in range(KS):
                off = s * NT + kt * dil * Nn
                for src in (norm, h):                    # half order matches wfg packing
                    cols = [src[b * C:(b + 1) * C, off:off + M] for b in range(Bblk)]
                    rhs_rows.append(cols[0] if Bblk == 1
                                    else jnp.concatenate(cols, axis=1))
        rhs = jnp.concatenate(rhs_rows, axis=0)                    # (CT, Bblk*M)

        pre = jnp.dot(wfg_ref[...], rhs,
                      preferred_element_type=jnp.float32) + bfg_ref[...]
        f = jnp.tanh(pre[0:OC])                                    # (OC, Bblk*M)
        g = jax.nn.sigmoid(pre[OC:2 * OC])
        gx = f * g

        # skip + residual 1x1x1 convs fused into one matmul
        sr = jnp.dot(wsr_ref[...], gx,
                     preferred_element_type=jnp.float32) + bsr_ref[...]

        # -------- pack (residual | skip | gate) + loss stats, lane-dense store ---
        for b in range(Bblk):
            c0, c1 = b * M, (b + 1) * M
            body = jnp.concatenate([sr[OC:2 * OC, c0:c1],          # residual conv out
                                    sr[0:OC, c0:c1],               # skip conv out
                                    g[:, c0:c1]], axis=0)          # gate   -> (3*OC, M)
            stat_cols = [fi_row[b * C:(b + 1) * C], kl_row[b * C:(b + 1) * C]]
            if PADW > 2:
                stat_cols.append(jnp.zeros((C, PADW - 2), jnp.float32))
            pad = jnp.concatenate(
                [jnp.concatenate(stat_cols, axis=1),
                 jnp.zeros((3 * OC - C, PADW), jnp.float32)], axis=0)  # (3*OC, PADW)
            out_ref[b] = jnp.concatenate([body, pad], axis=1)      # full 128-lane rows

    return kernel


# ------------------------------ weight prep -----------------------------------
def _prep_weights(params, C, S, Nn, T, K, KS):
    Nf = S * T * Nn
    OC = S * C

    # GMRE 1x1 Conv1d weights, fused and column-permuted to the kernel's
    # (s, t, n) lane order (original flat order of x.reshape is (s, n, t)).
    def perm(w):                                 # (K, Nf)
        return w.reshape(K, S, Nn, T).transpose(0, 1, 3, 2).reshape(K, Nf)

    w3 = jnp.concatenate([perm(params['wa']), perm(params['ws']),
                          perm(params['wm'])], axis=0).T            # (Nf, 3K)
    b3 = jnp.concatenate([params['ba'], params['bs'],
                          params['bm']]).reshape(1, 3 * K)

    # filter/gate Conv3d weights -> ONE lane-dense (2*OC, 2*C*S*KS) operand whose
    # column order matches the in-kernel RHS rows: (s, kt, {norm, x} half, c).
    wf = params['wfil'].reshape(OC, 2 * C, S, KS)
    wg = params['wgat'].reshape(OC, 2 * C, S, KS)
    wfull = jnp.concatenate([wf, wg], axis=0)                        # (2*OC, 2C, S, KS)
    halves = jnp.stack([wfull[:, :C], wfull[:, C:]], axis=1)         # (2*OC, 2, C, S, KS)
    wfg = halves.transpose(0, 3, 4, 1, 2).reshape(2 * OC, 2 * C * S * KS)
    bfg = jnp.concatenate([params['bfil'], params['bgat']]).reshape(2 * OC, 1)

    # skip / residual 1x1x1 convs act on the c index of the (c, s)-ordered conv
    # output channels: block-diagonal over s == kron(W, I_S); skip|residual fused.
    eye_s = jnp.eye(S, dtype=jnp.float32)
    wsr = jnp.concatenate([jnp.kron(params['wskip'], eye_s),
                           jnp.kron(params['wres'], eye_s)], axis=0)  # (2*OC, OC)
    bsr = jnp.concatenate([jnp.repeat(params['bskip'], S),
                           jnp.repeat(params['bres'], S)]).reshape(2 * OC, 1)
    return w3, b3, wfg, bfg, wsr, bsr


# ------------------------------ parameters -------------------------------------
def init_params(key, num_comp, num_nodes, num_source, n_his, channels, dilation, kernel_size):
    time = n_his - dilation + 1
    Nf = num_nodes * num_source * time
    K, C, S, KS = num_comp, channels, num_source, kernel_size
    OC, IC = S * C, 2 * C
    keys = jax.random.split(key, 14)

    def u(k, shape, fan_in):
        b = 1.0 / math.sqrt(fan_in)
        return jax.random.uniform(k, shape, jnp.float32, -b, b)

    p = {}
    p['wa'], p['ba'] = u(keys[0], (K, Nf), Nf), u(keys[1], (K,), Nf)
    p['ws'], p['bs'] = u(keys[2], (K, Nf), Nf), u(keys[3], (K,), Nf)
    p['wm'], p['bm'] = u(keys[4], (K, Nf), Nf), u(keys[5], (K,), Nf)
    fc = IC * S * KS
    p['wfil'], p['bfil'] = u(keys[6], (OC, IC, S, 1, KS), fc), u(keys[7], (OC,), fc)
    p['wgat'], p['bgat'] = u(keys[8], (OC, IC, S, 1, KS), fc), u(keys[9], (OC,), fc)
    p['wskip'], p['bskip'] = u(keys[10], (C, C), C), u(keys[11], (C,), C)
    p['wres'], p['bres'] = u(keys[12], (C, C), C), u(keys[13], (C,), C)
    return p


# ------------------------------ forward (glue) ----------------------------------
def residual_block_forward(x, params, num_comp, dilation, kernel_size):
    B, C, S, Nn, T = x.shape
    K, KS, dil = num_comp, kernel_size, dilation
    NT = T * Nn
    Nf = S * NT
    T_out = T - dil * (KS - 1)
    M = T_out * Nn
    OC = S * C

    # lane-aligned output width (keep >= 2 spare lanes for the per-channel stats)
    MPAD = ((M + 127) // 128) * 128
    if MPAD - M < 2:
        MPAD += 128

    # fold the batch: 2 grid steps keeps both v7x TensorCores busy; v5e/v6e just
    # amortize per-step overhead over Bblk elements.
    num_blocks = 2 if (B >= 2 and B % 2 == 0) else 1
    Bblk = B // num_blocks
    R = Bblk * C

    # kernel-internal lane order is (s, t, n): one tiny XLA transpose up front,
    # then batch elements of a block are stacked along the sublane (row) axis.
    xk = x.transpose(0, 1, 2, 4, 3).reshape(num_blocks, R, Nf)

    w3, b3, wfg, bfg, wsr, bsr = _prep_weights(params, C, S, Nn, T, K, KS)
    kernel = _make_kernel(C, S, Nn, T, K, KS, dil, Bblk, MPAD)

    out_packed = pl.pallas_call(
        kernel,
        out_shape=jax.ShapeDtypeStruct((B, 3 * OC, MPAD), jnp.float32),
        grid=(num_blocks,),
        in_specs=[pl.BlockSpec((1, R, Nf), lambda i: (i, 0, 0)),
                  pl.BlockSpec((Nf, 3 * K), lambda i: (0, 0)),
                  pl.BlockSpec((1, 3 * K), lambda i: (0, 0)),
                  pl.BlockSpec((2 * OC, 2 * C * S * KS), lambda i: (0, 0)),
                  pl.BlockSpec((2 * OC, 1), lambda i: (0, 0)),
                  pl.BlockSpec((2 * OC, OC), lambda i: (0, 0)),
                  pl.BlockSpec((2 * OC, 1), lambda i: (0, 0))],
        out_specs=pl.BlockSpec((Bblk, 3 * OC, MPAD), lambda i: (i, 0, 0)),
        compiler_params=pltpu.CompilerParams(dimension_semantics=("parallel",)),
    )(xk, w3, b3, wfg, bfg, wsr, bsr)

    # unpack the lane-dense slab: rows are (x_res|sk|gate, c, s), lanes (t_out, n)
    o = out_packed[:, :, :M].reshape(B, 3, C, S, T_out, Nn).transpose(1, 0, 2, 3, 5, 4)
    x_res, sk, gate = o[0], o[1], o[2]

    # loss finalization (stats stashed in pad lanes M and M+1 of rows 0..C-1)
    fi_sum = out_packed[:, 0:C, M]                     # per (b, c): sum_{Nf,K} gamma*lcp
    kl_sum = out_packed[:, 0:C, M + 1]                 # per (b, c): sum_K alpha*(log a - q_z)
    first_item = jnp.sum(fi_sum) / (B * C * Nf * K)    # torch.mean over (B, C, Nf, K)
    kl = jnp.sum(kl_sum) / B                           # F.kl_div(..., 'batchmean')
    loss = kl - first_item
    return x_res, sk, gate, loss


# ------------------------------------ main ---------------------------------------
if __name__ == "__main__":
    num_comp, num_nodes, num_source = 4, 8, 3
    n_pred, n_his, channels, dilation, kernel_size = 3, 13, 4, 2, 2
    time = n_his - dilation + 1   # GMRE Conv1d in_features require T == n_his - dilation + 1

    key = jax.random.PRNGKey(0)
    kx, kp = jax.random.split(key)
    x = jax.random.normal(kx, (2, channels, num_source, num_nodes, time), jnp.float32)
    params = init_params(kp, num_comp, num_nodes, num_source, n_his,
                         channels, dilation, kernel_size)

    fwd = jax.jit(lambda xx: residual_block_forward(
        xx, params, num_comp, dilation, kernel_size))
    out = fwd(x)
    jax.block_until_ready(out)
    x_out, sk_out, gate_out, loss_out = out
    t_out = time - dilation * (kernel_size - 1)
    assert x_out.shape == (2, channels, num_source, num_nodes, t_out)
    assert sk_out.shape == x_out.shape and gate_out.shape == x_out.shape
    assert loss_out.shape == ()
    assert bool(jnp.isfinite(loss_out))
    print("KERNEL_OK")
</pallas_src>

<mosaic_0001>
module attributes {stable_mosaic.version = 11 : i64} {
  func.func @kernel(%arg0: i32, %arg1: memref<1x4x288xf32, #tpu.memory_space<vmem>>, %arg2: memref<288x12xf32, #tpu.memory_space<vmem>>, %arg3: memref<1x12xf32, #tpu.memory_space<vmem>>, %arg4: memref<24x48xf32, #tpu.memory_space<vmem>>, %arg5: memref<24x1xf32, #tpu.memory_space<vmem>>, %arg6: memref<24x12xf32, #tpu.memory_space<vmem>>, %arg7: memref<24x1xf32, #tpu.memory_space<vmem>>, %arg8: memref<1x36x128xf32, #tpu.memory_space<vmem>>) attributes {dimension_semantics = [#tpu.dimension_semantics<parallel>], iteration_bounds = array<i64: 2>, scalar_prefetch = 0 : i64, scratch_operands = 0 : i64, tpu.core_type = #tpu.core_type<tc>, window_params = [{transform_indices = @transform_0, window_bounds = array<i64: 1, 4, 288>}, {pipeline_mode = #tpu.pipeline_mode<synchronous>, transform_indices = @transform_1, window_bounds = array<i64: 288, 12>}, {pipeline_mode = #tpu.pipeline_mode<synchronous>, transform_indices = @transform_2, window_bounds = array<i64: 1, 12>}, {pipeline_mode = #tpu.pipeline_mode<synchronous>, transform_indices = @transform_3, window_bounds = array<i64: 24, 48>}, {pipeline_mode = #tpu.pipeline_mode<synchronous>, transform_indices = @transform_4, window_bounds = array<i64: 24, 1>}, {pipeline_mode = #tpu.pipeline_mode<synchronous>, transform_indices = @transform_5, window_bounds = array<i64: 24, 12>}, {pipeline_mode = #tpu.pipeline_mode<synchronous>, transform_indices = @transform_6, window_bounds = array<i64: 24, 1>}, {transform_indices = @transform_7, window_bounds = array<i64: 1, 36, 128>}]} {
    %c0 = arith.constant 0 : index
    %c0_0 = arith.constant 0 : index
    %c0_1 = arith.constant 0 : index
    %0 = vector.load %arg1[%c0, %c0_0, %c0_1] : memref<1x4x288xf32, #tpu.memory_space<vmem>>, vector<1x4x288xf32>
    %1 = vector.shape_cast %0 : vector<1x4x288xf32> to vector<4x288xf32>
    %c0_2 = arith.constant 0 : index
    %c0_3 = arith.constant 0 : index
    %2 = vector.load %arg2[%c0_2, %c0_3] : memref<288x12xf32, #tpu.memory_space<vmem>>, vector<288x12xf32>
    %cst = arith.constant dense<0.000000e+00> : vector<4x12xf32>
    %3 = tpu.matmul %1, %2, %cst {dimension_numbers = #tpu.dot_dimension_numbers<[1], [0], [0], [1], [0, 0, 1, 1], [], []>} : vector<4x288xf32>, vector<288x12xf32>, vector<4x12xf32> -> vector<4x12xf32>
    %c0_4 = arith.constant 0 : index
    %c0_5 = arith.constant 0 : index
    %4 = vector.load %arg3[%c0_4, %c0_5] : memref<1x12xf32, #tpu.memory_space<vmem>>, vector<1x12xf32>
    %5 = vector.broadcast %4 : vector<1x12xf32> to vector<4x12xf32>
    %6 = arith.addf %3, %5 : vector<4x12xf32>
    %7 = vector.extract_strided_slice %6 {offsets = [0, 0], sizes = [4, 4], strides = [1, 1]} : vector<4x12xf32> to vector<4x4xf32>
    %8 = vector.extract_strided_slice %6 {offsets = [0, 4], sizes = [4, 4], strides = [1, 1]} : vector<4x12xf32> to vector<4x4xf32>
    %9 = vector.extract_strided_slice %6 {offsets = [0, 8], sizes = [4, 4], strides = [1, 1]} : vector<4x12xf32> to vector<4x4xf32>
    %cst_6 = arith.constant dense<0xFF800000> : vector<4xf32>
    %10 = vector.multi_reduction <maximumf>, %7, %cst_6 [1] : vector<4x4xf32> to vector<4xf32>
    %11 = vector.shape_cast %10 : vector<4xf32> to vector<4x1xf32>
    %12 = vector.broadcast %11 : vector<4x1xf32> to vector<4x4xf32>
    %13 = arith.subf %7, %12 : vector<4x4xf32>
    %14 = math.exp %13 : vector<4x4xf32>
    %cst_7 = arith.constant dense<0.000000e+00> : vector<4xf32>
    %15 = vector.multi_reduction <add>, %14, %cst_7 [1] : vector<4x4xf32> to vector<4xf32>
    %16 = vector.shape_cast %15 : vector<4xf32> to vector<4x1xf32>
    %17 = vector.broadcast %11 : vector<4x1xf32> to vector<4x4xf32>
    %18 = arith.subf %7, %17 : vector<4x4xf32>
    %19 = math.log %16 : vector<4x1xf32>
    %20 = vector.broadcast %19 : vector<4x1xf32> to vector<4x4xf32>
    %21 = arith.subf %18, %20 : vector<4x4xf32>
    %22 = tpu.reciprocal %16 : vector<4x1xf32> -> vector<4x1xf32>
    %23 = vector.broadcast %22 : vector<4x1xf32> to vector<4x4xf32>
    %24 = arith.mulf %14, %23 : vector<4x4xf32>
    %25 = vector.extract_strided_slice %9 {offsets = [0, 0], sizes = [4, 1], strides = [1, 1]} : vector<4x4xf32> to vector<4x1xf32>
    %26 = vector.extract_strided_slice %8 {offsets = [0, 0], sizes = [4, 1], strides = [1, 1]} : vector<4x4xf32> to vector<4x1xf32>
    %27 = math.exp %26 : vector<4x1xf32>
    %28 = vector.broadcast %25 : vector<4x1xf32> to vector<4x288xf32>
    %29 = arith.subf %1, %28 : vector<4x288xf32>
    %cst_8 = arith.constant 0.000000e+00 : f32
    %30 = vector.broadcast %cst_8 : f32 to vector<4x1xf32>
    %31 = arith.subf %30, %26 : vector<4x1xf32>
    %32 = math.exp %31 : vector<4x1xf32>
    %33 = vector.broadcast %32 : vector<4x1xf32> to vector<4x288xf32>
    %34 = arith.mulf %29, %33 : vector<4x288xf32>
    %cst_9 = arith.constant 0.000000e+00 : f32
    %35 = vector.broadcast %cst_9 : f32 to vector<4x1xf32>
    %36 = arith.subf %35, %26 : vector<4x1xf32>
    %cst_10 = arith.constant 0.918938517 : f32
    %37 = vector.broadcast %cst_10 : f32 to vector<4x1xf32>
    %38 = arith.subf %36, %37 : vector<4x1xf32>
    %cst_11 = arith.constant 5.000000e-01 : f32
    %39 = vector.broadcast %cst_11 : f32 to vector<4x288xf32>
    %40 = arith.mulf %39, %34 : vector<4x288xf32>
    %41 = arith.mulf %40, %34 : vector<4x288xf32>
    %42 = vector.broadcast %38 : vector<4x1xf32> to vector<4x288xf32>
    %43 = arith.subf %42, %41 : vector<4x288xf32>
    %44 = vector.extract_strided_slice %21 {offsets = [0, 0], sizes = [4, 1], strides = [1, 1]} : vector<4x4xf32> to vector<4x1xf32>
    %45 = vector.broadcast %44 : vector<4x1xf32> to vector<4x288xf32>
    %46 = arith.addf %43, %45 : vector<4x288xf32>
    %47 = vector.extract_strided_slice %9 {offsets = [0, 1], sizes = [4, 1], strides = [1, 1]} : vector<4x4xf32> to vector<4x1xf32>
    %48 = vector.extract_strided_slice %8 {offsets = [0, 1], sizes = [4, 1], strides = [1, 1]} : vector<4x4xf32> to vector<4x1xf32>
    %49 = math.exp %48 : vector<4x1xf32>
    %50 = vector.broadcast %47 : vector<4x1xf32> to vector<4x288xf32>
    %51 = arith.subf %1, %50 : vector<4x288xf32>
    %cst_12 = arith.constant 0.000000e+00 : f32
    %52 = vector.broadcast %cst_12 : f32 to vector<4x1xf32>
    %53 = arith.subf %52, %48 : vector<4x1xf32>
    %54 = math.exp %53 : vector<4x1xf32>
    %55 = vector.broadcast %54 : vector<4x1xf32> to vector<4x288xf32>
    %56 = arith.mulf %51, %55 : vector<4x288xf32>
    %cst_13 = arith.constant 0.000000e+00 : f32
    %57 = vector.broadcast %cst_13 : f32 to vector<4x1xf32>
    %58 = arith.subf %57, %48 : vector<4x1xf32>
    %cst_14 = arith.constant 0.918938517 : f32
    %59 = vector.broadcast %cst_14 : f32 to vector<4x1xf32>
    %60 = arith.subf %58, %59 : vector<4x1xf32>
    %cst_15 = arith.constant 5.000000e-01 : f32
    %61 = vector.broadcast %cst_15 : f32 to vector<4x288xf32>
    %62 = arith.mulf %61, %56 : vector<4x288xf32>
    %63 = arith.mulf %62, %56 : vector<4x288xf32>
    %64 = vector.broadcast %60 : vector<4x1xf32> to vector<4x288xf32>
    %65 = arith.subf %64, %63 : vector<4x288xf32>
    %66 = vector.extract_strided_slice %21 {offsets = [0, 1], sizes = [4, 1], strides = [1, 1]} : vector<4x4xf32> to vector<4x1xf32>
    %67 = vector.broadcast %66 : vector<4x1xf32> to vector<4x288xf32>
    %68 = arith.addf %65, %67 : vector<4x288xf32>
    %69 = arith.maximumf %46, %68 : vector<4x288xf32>
    %70 = arith.cmpf ogt, %68, %46 : vector<4x288xf32>
    %71 = arith.select %70, %68, %46 : vector<4x288xi1>, vector<4x288xf32>
    %72 = vector.shape_cast %49 : vector<4x1xf32> to vector<4x1xf32>
    %73 = vector.broadcast %72 : vector<4x1xf32> to vector<4x288xf32>
    %74 = vector.shape_cast %27 : vector<4x1xf32> to vector<4x1xf32>
    %75 = vector.broadcast %74 : vector<4x1xf32> to vector<4x288xf32>
    %76 = arith.select %70, %73, %75 : vector<4x288xi1>, vector<4x288xf32>
    %77 = vector.extract_strided_slice %9 {offsets = [0, 2], sizes = [4, 1], strides = [1, 1]} : vector<4x4xf32> to vector<4x1xf32>
    %78 = vector.extract_strided_slice %8 {offsets = [0, 2], sizes = [4, 1], strides = [1, 1]} : vector<4x4xf32> to vector<4x1xf32>
    %79 = math.exp %78 : vector<4x1xf32>
    %80 = vector.broadcast %77 : vector<4x1xf32> to vector<4x288xf32>
    %81 = arith.subf %1, %80 : vector<4x288xf32>
    %cst_16 = arith.constant 0.000000e+00 : f32
    %82 = vector.broadcast %cst_16 : f32 to vector<4x1xf32>
    %83 = arith.subf %82, %78 : vector<4x1xf32>
    %84 = math.exp %83 : vector<4x1xf32>
    %85 = vector.broadcast %84 : vector<4x1xf32> to vector<4x288xf32>
    %86 = arith.mulf %81, %85 : vector<4x288xf32>
    %cst_17 = arith.constant 0.000000e+00 : f32
    %87 = vector.broadcast %cst_17 : f32 to vector<4x1xf32>
    %88 = arith.subf %87, %78 : vector<4x1xf32>
    %cst_18 = arith.constant 0.918938517 : f32
    %89 = vector.broadcast %cst_18 : f32 to vector<4x1xf32>
    %90 = arith.subf %88, %89 : vector<4x1xf32>
    %cst_19 = arith.constant 5.000000e-01 : f32
    %91 = vector.broadcast %cst_19 : f32 to vector<4x288xf32>
    %92 = arith.mulf %91, %86 : vector<4x288xf32>
    %93 = arith.mulf %92, %86 : vector<4x288xf32>
    %94 = vector.broadcast %90 : vector<4x1xf32> to vector<4x288xf32>
    %95 = arith.subf %94, %93 : vector<4x288xf32>
    %96 = vector.extract_strided_slice %21 {offsets = [0, 2], sizes = [4, 1], strides = [1, 1]} : vector<4x4xf32> to vector<4x1xf32>
    %97 = vector.broadcast %96 : vector<4x1xf32> to vector<4x288xf32>
    %98 = arith.addf %95, %97 : vector<4x288xf32>
    %99 = arith.maximumf %69, %98 : vector<4x288xf32>
    %100 = arith.cmpf ogt, %98, %71 : vector<4x288xf32>
    %101 = arith.select %100, %98, %71 : vector<4x288xi1>, vector<4x288xf32>
    %102 = vector.shape_cast %79 : vector<4x1xf32> to vector<4x1xf32>
    %103 = vector.broadcast %102 : vector<4x1xf32> to vector<4x288xf32>
    %104 = arith.select %100, %103, %76 : vector<4x288xi1>, vector<4x288xf32>
    %105 = vector.extract_strided_slice %9 {offsets = [0, 3], sizes = [4, 1], strides = [1, 1]} : vector<4x4xf32> to vector<4x1xf32>
    %106 = vector.extract_strided_slice %8 {offsets = [0, 3], sizes = [4, 1], strides = [1, 1]} : vector<4x4xf32> to vector<4x1xf32>
    %107 = math.exp %106 : vector<4x1xf32>
    %108 = vector.broadcast %105 : vector<4x1xf32> to vector<4x288xf32>
    %109 = arith.subf %1, %108 : vector<4x288xf32>
    %cst_20 = arith.constant 0.000000e+00 : f32
    %110 = vector.broadcast %cst_20 : f32 to vector<4x1xf32>
    %111 = arith.subf %110, %106 : vector<4x1xf32>
    %112 = math.exp %111 : vector<4x1xf32>
    %113 = vector.broadcast %112 : vector<4x1xf32> to vector<4x288xf32>
    %114 = arith.mulf %109, %113 : vector<4x288xf32>
    %cst_21 = arith.constant 0.000000e+00 : f32
    %115 = vector.broadcast %cst_21 : f32 to vector<4x1xf32>
    %116 = arith.subf %115, %106 : vector<4x1xf32>
    %cst_22 = arith.constant 0.918938517 : f32
    %117 = vector.broadcast %cst_22 : f32 to vector<4x1xf32>
    %118 = arith.subf %116, %117 : vector<4x1xf32>
    %cst_23 = arith.constant 5.000000e-01 : f32
    %119 = vector.broadcast %cst_23 : f32 to vector<4x288xf32>
    %120 = arith.mulf %119, %114 : vector<4x288xf32>
    %121 = arith.mulf %120, %114 : vector<4x288xf32>
    %122 = vector.broadcast %118 : vector<4x1xf32> to vector<4x288xf32>
    %123 = arith.subf %122, %121 : vector<4x288xf32>
    %124 = vector.extract_strided_slice %21 {offsets = [0, 3], sizes = [4, 1], strides = [1, 1]} : vector<4x4xf32> to vector<4x1xf32>
    %125 = vector.broadcast %124 : vector<4x1xf32> to vector<4x288xf32>
    %126 = arith.addf %123, %125 : vector<4x288xf32>
    %127 = arith.maximumf %99, %126 : vector<4x288xf32>
    %128 = arith.cmpf ogt, %126, %101 : vector<4x288xf32>
    %129 = vector.shape_cast %107 : vector<4x1xf32> to vector<4x1xf32>
    %130 = vector.broadcast %129 : vector<4x1xf32> to vector<4x288xf32>
    %131 = arith.select %128, %130, %104 : vector<4x288xi1>, vector<4x288xf32>
    %132 = arith.subf %1, %131 : vector<4x288xf32>
    %cst_24 = arith.constant 9.99999974E-6 : f32
    %133 = vector.broadcast %cst_24 : f32 to vector<4x288xf32>
    %134 = arith.addf %131, %133 : vector<4x288xf32>
    %135 = arith.divf %132, %134 : vector<4x288xf32>
    %136 = arith.subf %46, %127 : vector<4x288xf32>
    %137 = math.exp %136 : vector<4x288xf32>
    %138 = arith.mulf %137, %43 : vector<4x288xf32>
    %139 = arith.subf %68, %127 : vector<4x288xf32>
    %140 = math.exp %139 : vector<4x288xf32>
    %141 = arith.mulf %140, %65 : vector<4x288xf32>
    %142 = arith.addf %137, %140 : vector<4x288xf32>
    %143 = arith.addf %138, %141 : vector<4x288xf32>
    %144 = arith.subf %98, %127 : vector<4x288xf32>
    %145 = math.exp %144 : vector<4x288xf32>
    %146 = arith.mulf %145, %95 : vector<4x288xf32>
    %147 = arith.addf %142, %145 : vector<4x288xf32>
    %148 = arith.addf %143, %146 : vector<4x288xf32>
    %149 = arith.subf %126, %127 : vector<4x288xf32>
    %150 = math.exp %149 : vector<4x288xf32>
    %151 = arith.mulf %150, %123 : vector<4x288xf32>
    %152 = arith.addf %147, %150 : vector<4x288xf32>
    %153 = arith.addf %148, %151 : vector<4x288xf32>
    %154 = tpu.reciprocal %152 : vector<4x288xf32> -> vector<4x288xf32>
    %155 = math.log %152 : vector<4x288xf32>
    %156 = arith.addf %127, %155 : vector<4x288xf32>
    %157 = arith.mulf %153, %154 : vector<4x288xf32>
    %cst_25 = arith.constant dense<0.000000e+00> : vector<4xf32>
    %158 = vector.multi_reduction <add>, %157, %cst_25 [1] : vector<4x288xf32> to vector<4xf32>
    %159 = vector.shape_cast %158 : vector<4xf32> to vector<4x1xf32>
    %cst_26 = arith.constant dense<0.000000e+00> : vector<4xf32>
    %160 = vector.multi_reduction <add>, %156, %cst_26 [1] : vector<4x288xf32> to vector<4xf32>
    %161 = vector.shape_cast %160 : vector<4xf32> to vector<4x1xf32>
    %cst_27 = arith.constant 0.00347222225 : f32
    %162 = vector.broadcast %cst_27 : f32 to vector<4x1xf32>
    %163 = arith.mulf %161, %162 : vector<4x1xf32>
    %cst_28 = arith.constant dense<0.000000e+00> : vector<4xf32>
    %164 = vector.multi_reduction <add>, %46, %cst_28 [1] : vector<4x288xf32> to vector<4xf32>
    %165 = vector.shape_cast %164 : vector<4xf32> to vector<4x1xf32>
    %cst_29 = arith.constant 0.00347222225 : f32
    %166 = vector.broadcast %cst_29 : f32 to vector<4x1xf32>
    %167 = arith.mulf %165, %166 : vector<4x1xf32>
    %168 = arith.subf %167, %163 : vector<4x1xf32>
    %169 = vector.extract_strided_slice %24 {offsets = [0, 0], sizes = [4, 1], strides = [1, 1]} : vector<4x4xf32> to vector<4x1xf32>
    %170 = vector.extract_strided_slice %21 {offsets = [0, 0], sizes = [4, 1], strides = [1, 1]} : vector<4x4xf32> to vector<4x1xf32>
    %171 = arith.subf %170, %168 : vector<4x1xf32>
    %172 = arith.mulf %169, %171 : vector<4x1xf32>
    %cst_30 = arith.constant dense<0.000000e+00> : vector<4xf32>
    %173 = vector.multi_reduction <add>, %68, %cst_30 [1] : vector<4x288xf32> to vector<4xf32>
    %174 = vector.shape_cast %173 : vector<4xf32> to vector<4x1xf32>
    %cst_31 = arith.constant 0.00347222225 : f32
    %175 = vector.broadcast %cst_31 : f32 to vector<4x1xf32>
    %176 = arith.mulf %174, %175 : vector<4x1xf32>
    %177 = arith.subf %176, %163 : vector<4x1xf32>
    %178 = vector.extract_strided_slice %24 {offsets = [0, 1], sizes = [4, 1], strides = [1, 1]} : vector<4x4xf32> to vector<4x1xf32>
    %179 = vector.extract_strided_slice %21 {offsets = [0, 1], sizes = [4, 1], strides = [1, 1]} : vector<4x4xf32> to vector<4x1xf32>
    %180 = arith.subf %179, %177 : vector<4x1xf32>
    %181 = arith.mulf %178, %180 : vector<4x1xf32>
    %182 = arith.addf %172, %181 : vector<4x1xf32>
    %cst_32 = arith.constant dense<0.000000e+00> : vector<4xf32>
    %183 = vector.multi_reduction <add>, %98, %cst_32 [1] : vector<4x288xf32> to vector<4xf32>
    %184 = vector.shape_cast %183 : vector<4xf32> to vector<4x1xf32>
    %cst_33 = arith.constant 0.00347222225 : f32
    %185 = vector.broadcast %cst_33 : f32 to vector<4x1xf32>
    %186 = arith.mulf %184, %185 : vector<4x1xf32>
    %187 = arith.subf %186, %163 : vector<4x1xf32>
    %188 = vector.extract_strided_slice %24 {offsets = [0, 2], sizes = [4, 1], strides = [1, 1]} : vector<4x4xf32> to vector<4x1xf32>
    %189 = vector.extract_strided_slice %21 {offsets = [0, 2], sizes = [4, 1], strides = [1, 1]} : vector<4x4xf32> to vector<4x1xf32>
    %190 = arith.subf %189, %187 : vector<4x1xf32>
    %191 = arith.mulf %188, %190 : vector<4x1xf32>
    %192 = arith.addf %182, %191 : vector<4x1xf32>
    %cst_34 = arith.constant dense<0.000000e+00> : vector<4xf32>
    %193 = vector.multi_reduction <add>, %126, %cst_34 [1] : vector<4x288xf32> to vector<4xf32>
    %194 = vector.shape_cast %193 : vector<4xf32> to vector<4x1xf32>
    %cst_35 = arith.constant 0.00347222225 : f32
    %195 = vector.broadcast %cst_35 : f32 to vector<4x1xf32>
    %196 = arith.mulf %194, %195 : vector<4x1xf32>
    %197 = arith.subf %196, %163 : vector<4x1xf32>
    %198 = vector.extract_strided_slice %24 {offsets = [0, 3], sizes = [4, 1], strides = [1, 1]} : vector<4x4xf32> to vector<4x1xf32>
    %199 = vector.extract_strided_slice %21 {offsets = [0, 3], sizes = [4, 1], strides = [1, 1]} : vector<4x4xf32> to vector<4x1xf32>
    %200 = arith.subf %199, %197 : vector<4x1xf32>
    %201 = arith.mulf %198, %200 : vector<4x1xf32>
    %202 = arith.addf %192, %201 : vector<4x1xf32>
    %203 = vector.extract_strided_slice %135 {offsets = [0, 0], sizes = [4, 80], strides = [1, 1]} : vector<4x288xf32> to vector<4x80xf32>
    %204 = vector.extract_strided_slice %1 {offsets = [0, 0], sizes = [4, 80], strides = [1, 1]} : vector<4x288xf32> to vector<4x80xf32>
    %205 = vector.extract_strided_slice %135 {offsets = [0, 16], sizes = [4, 80], strides = [1, 1]} : vector<4x288xf32> to vector<4x80xf32>
    %206 = vector.extract_strided_slice %1 {offsets = [0, 16], sizes = [4, 80], strides = [1, 1]} : vector<4x288xf32> to vector<4x80xf32>
    %207 = vector.extract_strided_slice %135 {offsets = [0, 96], sizes = [4, 80], strides = [1, 1]} : vector<4x288xf32> to vector<4x80xf32>
    %208 = vector.extract_strided_slice %1 {offsets = [0, 96], sizes = [4, 80], strides = [1, 1]} : vector<4x288xf32> to vector<4x80xf32>
    %209 = vector.extract_strided_slice %135 {offsets = [0, 112], sizes = [4, 80], strides = [1, 1]} : vector<4x288xf32> to vector<4x80xf32>
    %210 = vector.extract_strided_slice %1 {offsets = [0, 112], sizes = [4, 80], strides = [1, 1]} : vector<4x288xf32> to vector<4x80xf32>
    %211 = vector.extract_strided_slice %135 {offsets = [0, 192], sizes = [4, 80], strides = [1, 1]} : vector<4x288xf32> to vector<4x80xf32>
    %212 = vector.extract_strided_slice %1 {offsets = [0, 192], sizes = [4, 80], strides = [1, 1]} : vector<4x288xf32> to vector<4x80xf32>
    %213 = vector.extract_strided_slice %135 {offsets = [0, 208], sizes = [4, 80], strides = [1, 1]} : vector<4x288xf32> to vector<4x80xf32>
    %214 = vector.extract_strided_slice %1 {offsets = [0, 208], sizes = [4, 80], strides = [1, 1]} : vector<4x288xf32> to vector<4x80xf32>
    %215 = tpu.concatenate %203, %204, %205, %206, %207, %208, %209, %210, %211, %212, %213, %214 in 0 : vector<4x80xf32>, vector<4x80xf32>, vector<4x80xf32>, vector<4x80xf32>, vector<4x80xf32>, vector<4x80xf32>, vector<4x80xf32>, vector<4x80xf32>, vector<4x80xf32>, vector<4x80xf32>, vector<4x80xf32>, vector<4x80xf32> -> vector<48x80xf32>
    %c0_36 = arith.constant 0 : index
    %c0_37 = arith.constant 0 : index
    %216 = vector.load %arg4[%c0_36, %c0_37] : memref<24x48xf32, #tpu.memory_space<vmem>>, vector<24x48xf32>
    %cst_38 = arith.constant dense<0.000000e+00> : vector<24x80xf32>
    %217 = tpu.matmul %216, %215, %cst_38 {dimension_numbers = #tpu.dot_dimension_numbers<[1], [0], [0], [1], [0, 0, 1, 1], [], []>} : vector<24x48xf32>, vector<48x80xf32>, vector<24x80xf32> -> vector<24x80xf32>
    %c0_39 = arith.constant 0 : index
    %c0_40 = arith.constant 0 : index
    %218 = vector.load %arg5[%c0_39, %c0_40] : memref<24x1xf32, #tpu.memory_space<vmem>>, vector<24x1xf32>
    %219 = vector.broadcast %218 : vector<24x1xf32> to vector<24x80xf32>
    %220 = arith.addf %217, %219 : vector<24x80xf32>
    %221 = vector.extract_strided_slice %220 {offsets = [0, 0], sizes = [12, 80], strides = [1, 1]} : vector<24x80xf32> to vector<12x80xf32>
    %222 = math.tanh %221 : vector<12x80xf32>
    %223 = vector.extract_strided_slice %220 {offsets = [12, 0], sizes = [12, 80], strides = [1, 1]} : vector<24x80xf32> to vector<12x80xf32>
    %224 = arith.negf %223 : vector<12x80xf32>
    %225 = math.exp %224 : vector<12x80xf32>
    %cst_41 = arith.constant 1.000000e+00 : f32
    %226 = vector.broadcast %cst_41 : f32 to vector<12x80xf32>
    %227 = arith.addf %226, %225 : vector<12x80xf32>
    %228 = arith.divf %226, %227 : vector<12x80xf32>
    %229 = arith.mulf %222, %228 : vector<12x80xf32>
    %c0_42 = arith.constant 0 : index
    %c0_43 = arith.constant 0 : index
    %230 = vector.load %arg6[%c0_42, %c0_43] : memref<24x12xf32, #tpu.memory_space<vmem>>, vector<24x12xf32>
    %cst_44 = arith.constant dense<0.000000e+00> : vector<24x80xf32>
    %231 = tpu.matmul %230, %229, %cst_44 {dimension_numbers = #tpu.dot_dimension_numbers<[1], [0], [0], [1], [0, 0, 1, 1], [], []>} : vector<24x12xf32>, vector<12x80xf32>, vector<24x80xf32> -> vector<24x80xf32>
    %c0_45 = arith.constant 0 : index
    %c0_46 = arith.constant 0 : index
    %232 = vector.load %arg7[%c0_45, %c0_46] : memref<24x1xf32, #tpu.memory_space<vmem>>, vector<24x1xf32>
    %233 = vector.broadcast %232 : vector<24x1xf32> to vector<24x80xf32>
    %234 = arith.addf %231, %233 : vector<24x80xf32>
    %235 = vector.extract_strided_slice %234 {offsets = [12, 0], sizes = [12, 80], strides = [1, 1]} : vector<24x80xf32> to vector<12x80xf32>
    %236 = vector.extract_strided_slice %234 {offsets = [0, 0], sizes = [12, 80], strides = [1, 1]} : vector<24x80xf32> to vector<12x80xf32>
    %237 = tpu.concatenate %235, %236, %228 in 0 : vector<12x80xf32>, vector<12x80xf32>, vector<12x80xf32> -> vector<36x80xf32>
    %cst_47 = arith.constant 0.000000e+00 : f32
    %238 = vector.broadcast %cst_47 : f32 to vector<4x46xf32>
    %239 = tpu.concatenate %159, %202, %238 in 1 : vector<4x1xf32>, vector<4x1xf32>, vector<4x46xf32> -> vector<4x48xf32>
    %cst_48 = arith.constant 0.000000e+00 : f32
    %240 = vector.broadcast %cst_48 : f32 to vector<32x48xf32>
    %241 = tpu.concatenate %239, %240 in 0 : vector<4x48xf32>, vector<32x48xf32> -> vector<36x48xf32>
    %242 = tpu.concatenate %237, %241 in 1 : vector<36x80xf32>, vector<36x48xf32> -> vector<36x128xf32>
    %c0_49 = arith.constant 0 : index
    %c0_50 = arith.constant 0 : index
    %c0_51 = arith.constant 0 : index
    %243 = vector.load %arg8[%c0_49, %c0_50, %c0_51] : memref<1x36x128xf32, #tpu.memory_space<vmem>>, vector<1x36x128xf32>
    %244 = vector.shape_cast %243 : vector<1x36x128xf32> to vector<36x128xf32>
    %245 = vector.shape_cast %242 : vector<36x128xf32> to vector<1x36x128xf32>
    tpu.vector_store %arg8[%c0_49, %c0_50, %c0_51], %245 {strides = array<i32>} : memref<1x36x128xf32, #tpu.memory_space<vmem>>, vector<1x36x128xf32>,
    return
  }
  func.func @transform_0(%arg0: i32) -> (i32, i32, i32) {
    %c0_i32 = arith.constant 0 : i32
    %c0_i32_0 = arith.constant 0 : i32
    %c0_i32_1 = arith.constant 0 : i32
    return %arg0, %c0_i32, %c0_i32_0 : i32, i32, i32
  }
  func.func @transform_1(%arg0: i32) -> (i32, i32) {
    %c0_i32 = arith.constant 0 : i32
    %c0_i32_0 = arith.constant 0 : i32
    %c0_i32_1 = arith.constant 0 : i32
    return %c0_i32, %c0_i32_0 : i32, i32
  }
  func.func @transform_2(%arg0: i32) -> (i32, i32) {
    %c0_i32 = arith.constant 0 : i32
    %c0_i32_0 = arith.constant 0 : i32
    %c0_i32_1 = arith.constant 0 : i32
    return %c0_i32, %c0_i32_0 : i32, i32
  }
  func.func @transform_3(%arg0: i32) -> (i32, i32) {
    %c0_i32 = arith.constant 0 : i32
    %c0_i32_0 = arith.constant 0 : i32
    %c0_i32_1 = arith.constant 0 : i32
    return %c0_i32, %c0_i32_0 : i32, i32
  }
  func.func @transform_4(%arg0: i32) -> (i32, i32) {
    %c0_i32 = arith.constant 0 : i32
    %c0_i32_0 = arith.constant 0 : i32
    %c0_i32_1 = arith.constant 0 : i32
    return %c0_i32, %c0_i32_0 : i32, i32
  }
  func.func @transform_5(%arg0: i32) -> (i32, i32) {
    %c0_i32 = arith.constant 0 : i32
    %c0_i32_0 = arith.constant 0 : i32
    %c0_i32_1 = arith.constant 0 : i32
    return %c0_i32, %c0_i32_0 : i32, i32
  }
  func.func @transform_6(%arg0: i32) -> (i32, i32) {
    %c0_i32 = arith.constant 0 : i32
    %c0_i32_0 = arith.constant 0 : i32
    %c0_i32_1 = arith.constant 0 : i32
    return %c0_i32, %c0_i32_0 : i32, i32
  }
  func.func @transform_7(%arg0: i32) -> (i32, i32, i32) {
    %c0_i32 = arith.constant 0 : i32
    %c0_i32_0 = arith.constant 0 : i32
    %c0_i32_1 = arith.constant 0 : i32
    return %arg0, %c0_i32, %c0_i32_0 : i32, i32, i32
  }
}

</mosaic_0001>

<llo_original>
// kernel: _lambda_.1
$region0: #{_lambda_.1}
  #allocation0 [shape = 'u32[]', space=smem, size = 0x4, offset = 0x4, fixed_abs, tag = 'smem constant byte address 0x4 - core index']
  #allocation1 [shape = 'u32[144,128]{1,0:T(1,128)}', space=vmem, size = 0x12000, scoped, tag = 'internal scratch']
  %s0 = inlined_call_operand.vmem [shape: f32[2,4,288], index: 0, kind: input, shape index: {}]
  %s1 = inlined_call_operand.vmem [shape: f32[288,12], index: 1, kind: input, shape index: {}]
  %s2 = inlined_call_operand.vmem [shape: f32[1,12], index: 2, kind: input, shape index: {}]
  %s3 = inlined_call_operand.vmem [shape: f32[24,48], index: 3, kind: input, shape index: {}]
  %s4 = inlined_call_operand.vmem [shape: f32[24,1], index: 4, kind: input, shape index: {}]
  %s5 = inlined_call_operand.vmem [shape: f32[24,12], index: 5, kind: input, shape index: {}]
  %s6 = inlined_call_operand.vmem [shape: f32[24,1], index: 6, kind: input, shape index: {}]
  %s7 = inlined_call_operand.vmem [shape: f32[2,36,128], index: 7, kind: output, shape index: {}]
  %s8 = sld [smem:[#allocation0]]
  $region61: #{_lambda_.1} parent=0
    _
  %s10 = ssub.s32 1, %s8
  %s11 = scalar_select 0, %s10, %s8
  loop: start=0, step=1, limit=4
  $region2: #{_lambda_.1} parent=0 // loop_pre_header
    _
  $region3: #{_lambda_.1} parent=0 // loop_header
    %s13 = sphi 0, %s17
    %p14 = scmp.ge.s32.totalorder %s13, 4
    %s23 = sphi 0, %s25
    %s26 = sphi 0, %s23
    %s27 = sphi 0, %s26
    %s43 = sphi 0, %s27
    %s47 = sphi 0, %s47
    %s49 = sphi 0, %s47
    %s50 = sphi 0, %s49
    %s64 = sphi 0, %s50
    %s68 = sphi 0, %s68
    %s70 = sphi 0, %s68
    %s71 = sphi 0, %s70
    %s85 = sphi 0, %s71
    %s89 = sphi 0, %s89
    %s91 = sphi 0, %s89
    %s92 = sphi 0, %s91
    %s106 = sphi 0, %s92
    %s110 = sphi 0, %s110
    %s112 = sphi 0, %s110
    %s113 = sphi 0, %s112
    %s127 = sphi 0, %s113
    %s131 = sphi 0, %s131
    %s133 = sphi 0, %s131
    %s134 = sphi 0, %s133
    %s148 = sphi 0, %s134
    %s152 = sphi 0, %s152
    %s154 = sphi 0, %s152
    %s155 = sphi 0, %s154
    %s169 = sphi 0, %s155
    %s175 = sphi 0, %s177
    %s178 = sphi 0, %s175
    %s179 = sphi 0, %s178
    %s195 = sphi 0, %s179
  $region4: #{_lambda_.1} parent=0 // loop_header_branch
    %16 = sbr.rel (%p14) target = $region8
  $region5: #{_lambda_.1} parent=0 // loop_body
    %s18 = ssub.s32 %s13, 1
    %s19 = ssub.s32 %s13, 2
    %s20 = sadd.s32 %s13, 1
    %s21 = ssub.s32 %s13, %s20
    %p22 = scmp.eq.s32.totalorder %s21, 0
    %s24 = sadd.s32 %s23, 1
    %s25 = scalar_select %p22, %s23, %s24
    %p28 = pneg %p22
    %p29 = scmp.eq.s32.totalorder %s13, 1
    %p30 = por %p28, %p29
    %p31 = scmp.ne.s32.totalorder %s23, %s26
    %p32 = scmp.eq.s32.totalorder %s13, 0
    %p33 = por %p31, %p32
    %p34 = scmp.ne.s32.totalorder %s23, %s26
    %p35 = scmp.eq.s32.totalorder %s18, 1
    %p36 = por %p34, %p35
    %p37 = scmp.ne.s32.totalorder %s26, %s27
    %p38 = scmp.eq.s32.totalorder %s18, 0
    %p39 = por %p37, %p38
    %p40 = scmp.ne.s32.totalorder %s26, %s27
    %p41 = scmp.eq.s32.totalorder %s19, 1
    %p42 = por %p40, %p41
    %p44 = scmp.ne.s32.totalorder %s27, %s43
    %p45 = scmp.eq.s32.totalorder %s19, 0
    %p46 = por %p44, %p45
    %s48 = sadd.s32 %s47, 1
    %p51 = scmp.eq.s32.totalorder %s13, 1
    %p52 = scmp.ne.s32.totalorder %s47, %s49
    %p53 = scmp.eq.s32.totalorder %s13, 0
    %p54 = por %p52, %p53
    %p55 = scmp.ne.s32.totalorder %s47, %s49
    %p56 = scmp.eq.s32.totalorder %s18, 1
    %p57 = por %p55, %p56
    %p58 = scmp.ne.s32.totalorder %s49, %s50
    %p59 = scmp.eq.s32.totalorder %s18, 0
    %p60 = por %p58, %p59
    %p61 = scmp.ne.s32.totalorder %s49, %s50
    %p62 = scmp.eq.s32.totalorder %s19, 1
    %p63 = por %p61, %p62
    %p65 = scmp.ne.s32.totalorder %s50, %s64
    %p66 = scmp.eq.s32.totalorder %s19, 0
    %p67 = por %p65, %p66
    %s69 = sadd.s32 %s68, 1
    %p72 = scmp.eq.s32.totalorder %s13, 1
    %p73 = scmp.ne.s32.totalorder %s68, %s70
    %p74 = scmp.eq.s32.totalorder %s13, 0
    %p75 = por %p73, %p74
    %p76 = scmp.ne.s32.totalorder %s68, %s70
    %p77 = scmp.eq.s32.totalorder %s18, 1
    %p78 = por %p76, %p77
    %p79 = scmp.ne.s32.totalorder %s70, %s71
    %p80 = scmp.eq.s32.totalorder %s18, 0
    %p81 = por %p79, %p80
    %p82 = scmp.ne.s32.totalorder %s70, %s71
    %p83 = scmp.eq.s32.totalorder %s19, 1
    %p84 = por %p82, %p83
    %p86 = scmp.ne.s32.totalorder %s71, %s85
    %p87 = scmp.eq.s32.totalorder %s19, 0
    %p88 = por %p86, %p87
    %s90 = sadd.s32 %s89, 1
    %p93 = scmp.eq.s32.totalorder %s13, 1
    %p94 = scmp.ne.s32.totalorder %s89, %s91
    %p95 = scmp.eq.s32.totalorder %s13, 0
    %p96 = por %p94, %p95
    %p97 = scmp.ne.s32.totalorder %s89, %s91
    %p98 = scmp.eq.s32.totalorder %s18, 1
    %p99 = por %p97, %p98
    %p100 = scmp.ne.s32.totalorder %s91, %s92
    %p101 = scmp.eq.s32.totalorder %s18, 0
    %p102 = por %p100, %p101
    %p103 = scmp.ne.s32.totalorder %s91, %s92
    %p104 = scmp.eq.s32.totalorder %s19, 1
    %p105 = por %p103, %p104
    %p107 = scmp.ne.s32.totalorder %s92, %s106
    %p108 = scmp.eq.s32.totalorder %s19, 0
    %p109 = por %p107, %p108
    %s111 = sadd.s32 %s110, 1
    %p114 = scmp.eq.s32.totalorder %s13, 1
    %p115 = scmp.ne.s32.totalorder %s110, %s112
    %p116 = scmp.eq.s32.totalorder %s13, 0
    %p117 = por %p115, %p116
    %p118 = scmp.ne.s32.totalorder %s110, %s112
    %p119 = scmp.eq.s32.totalorder %s18, 1
    %p120 = por %p118, %p119
    %p121 = scmp.ne.s32.totalorder %s112, %s113
    %p122 = scmp.eq.s32.totalorder %s18, 0
    %p123 = por %p121, %p122
    %p124 = scmp.ne.s32.totalorder %s112, %s113
    %p125 = scmp.eq.s32.totalorder %s19, 1
    %p126 = por %p124, %p125
    %p128 = scmp.ne.s32.totalorder %s113, %s127
    %p129 = scmp.eq.s32.totalorder %s19, 0
    %p130 = por %p128, %p129
    %s132 = sadd.s32 %s131, 1
    %p135 = scmp.eq.s32.totalorder %s13, 1
    %p136 = scmp.ne.s32.totalorder %s131, %s133
    %p137 = scmp.eq.s32.totalorder %s13, 0
    %p138 = por %p136, %p137
    %p139 = scmp.ne.s32.totalorder %s131, %s133
    %p140 = scmp.eq.s32.totalorder %s18, 1
    %p141 = por %p139, %p140
    %p142 = scmp.ne.s32.totalorder %s133, %s134
    %p143 = scmp.eq.s32.totalorder %s18, 0
    %p144 = por %p142, %p143
    %p145 = scmp.ne.s32.totalorder %s133, %s134
    %p146 = scmp.eq.s32.totalorder %s19, 1
    %p147 = por %p145, %p146
    %p149 = scmp.ne.s32.totalorder %s134, %s148
    %p150 = scmp.eq.s32.totalorder %s19, 0
    %p151 = por %p149, %p150
    %s153 = sadd.s32 %s152, 1
    %p156 = scmp.eq.s32.totalorder %s13, 1
    %p157 = scmp.ne.s32.totalorder %s152, %s154
    %p158 = scmp.eq.s32.totalorder %s13, 0
    %p159 = por %p157, %p158
    %p160 = scmp.ne.s32.totalorder %s152, %s154
    %p161 = scmp.eq.s32.totalorder %s18, 1
    %p162 = por %p160, %p161
    %p163 = scmp.ne.s32.totalorder %s154, %s155
    %p164 = scmp.eq.s32.totalorder %s18, 0
    %p165 = por %p163, %p164
    %p166 = scmp.ne.s32.totalorder %s154, %s155
    %p167 = scmp.eq.s32.totalorder %s19, 1
    %p168 = por %p166, %p167
    %p170 = scmp.ne.s32.totalorder %s155, %s169
    %p171 = scmp.eq.s32.totalorder %s19, 0
    %p172 = por %p170, %p171
    %s173 = ssub.s32 %s13, %s20
    %p174 = scmp.eq.s32.totalorder %s173, 0
    %s176 = sadd.s32 %s175, 1
    %s177 = scalar_select %p174, %s175, %s176
    %p180 = pneg %p174
    %p181 = scmp.eq.s32.totalorder %s13, 1
    %p182 = por %p180, %p181
    %p183 = scmp.ne.s32.totalorder %s175, %s178
    %p184 = scmp.eq.s32.totalorder %s13, 0
    %p185 = por %p183, %p184
    %p186 = scmp.ne.s32.totalorder %s175, %s178
    %p187 = scmp.eq.s32.totalorder %s18, 1
    %p188 = por %p186, %p187
    %p189 = scmp.ne.s32.totalorder %s178, %s179
    %p190 = scmp.eq.s32.totalorder %s18, 0
    %p191 = por %p189, %p190
    %p192 = scmp.ne.s32.totalorder %s178, %s179
    %p193 = scmp.eq.s32.totalorder %s19, 1
    %p194 = por %p192, %p193
    %p196 = scmp.ne.s32.totalorder %s179, %s195
    %p197 = scmp.eq.s32.totalorder %s19, 0
    %p198 = por %p196, %p197
    %p199 = scmp.le.s32.totalorder 1, %s13
    %p200 = scmp.lt.s32.totalorder %s13, 3
    %p201 = pnand %p199, %p200
    %p202 = pneg %p201
    // Predicated region
    $region9: #{_lambda_.1} parent=5 // pred_check
      _
    $region10: #{_lambda_.1} parent=5 // pred_check_branch
      %204 = sbr.rel (%p201) target = $region12
    $region11: #{_lambda_.1} parent=5 // pred_region
      %s205 = ssub.s32 %s13, 1
      // Predicated region
      $region13: #{_lambda_.1} parent=11 // pred_check
        %p206 = pneg %p60
      $region14: #{_lambda_.1} parent=11 // pred_check_branch
        %208 = sbr.rel (%p206) target = $region16
      $region15: #{_lambda_.1} parent=11 // pred_region
        _
      $region16: #{_lambda_.1} parent=11 // pred_fallthru
        _
      // Predicated region
      $region17: #{_lambda_.1} parent=11 // pred_check
        %p209 = pneg %p81
      $region18: #{_lambda_.1} parent=11 // pred_check_branch
        %211 = sbr.rel (%p209) target = $region20
      $region19: #{_lambda_.1} parent=11 // pred_region
        _
      $region20: #{_lambda_.1} parent=11 // pred_fallthru
        _
      // Predicated region
      $region21: #{_lambda_.1} parent=11 // pred_check
        %p212 = pneg %p102
      $region22: #{_lambda_.1} parent=11 // pred_check_branch
        %214 = sbr.rel (%p212) target = $region24
      $region23: #{_lambda_.1} parent=11 // pred_region
        _
      $region24: #{_lambda_.1} parent=11 // pred_fallthru
        _
      // Predicated region
      $region25: #{_lambda_.1} parent=11 // pred_check
        %p215 = pneg %p123
      $region26: #{_lambda_.1} parent=11 // pred_check_branch
        %217 = sbr.rel (%p215) target = $region28
      $region27: #{_lambda_.1} parent=11 // pred_region
        _
      $region28: #{_lambda_.1} parent=11 // pred_fallthru
        _
      // Predicated region
      $region29: #{_lambda_.1} parent=11 // pred_check
        %p218 = pneg %p144
      $region30: #{_lambda_.1} parent=11 // pred_check_branch
        %220 = sbr.rel (%p218) target = $region32
      $region31: #{_lambda_.1} parent=11 // pred_region
        _
      $region32: #{_lambda_.1} parent=11 // pred_fallthru
        _
      // Predicated region
      $region33: #{_lambda_.1} parent=11 // pred_check
        %p221 = pneg %p165
      $region34: #{_lambda_.1} parent=11 // pred_check_branch
        %223 = sbr.rel (%p221) target = $region36
      $region35: #{_lambda_.1} parent=11 // pred_region
        _
      $region36: #{_lambda_.1} parent=11 // pred_fallthru
        _
    $region12: #{_lambda_.1} parent=5 // pred_fallthru
      _
    %p224 = scmp.lt.s32.totalorder %s13, 2
    // Predicated region
    $region37: #{_lambda_.1} parent=5 // pred_check
      %p225 = pneg %p224
    $region38: #{_lambda_.1} parent=5 // pred_check_branch
      %227 = sbr.rel (%p225) target = $region40
    $region39: #{_lambda_.1} parent=5 // pred_region
      // Predicated region
      $region41: #{_lambda_.1} parent=39 // pred_check
        %p228 = pneg %p33
      $region42: #{_lambda_.1} parent=39 // pred_check_branch
        %230 = sbr.rel (%p228) target = $region44
      $region43: #{_lambda_.1} parent=39 // pred_region
        %p231 = scmp.lt.s32.totalorder %s13, 1
        %s232 = scalar_select %p231, %s13, 1
        %s233 = smul.addr %s232, 3
        %s234 = smul.addr %s233, 4
        %s235 = scalar_lea.vmem %s0, %s234
      $region44: #{_lambda_.1} parent=39 // pred_fallthru
        _
    $region40: #{_lambda_.1} parent=5 // pred_fallthru
      _
    %p236 = scmp.le.s32.totalorder 1, %s13
    %p237 = scmp.lt.s32.totalorder %s13, 3
    %p238 = pnand %p236, %p237
    %p239 = pneg %p238
    // Predicated region
    $region45: #{_lambda_.1} parent=5 // pred_check
      _
    $region46: #{_lambda_.1} parent=5 // pred_check_branch
      %241 = sbr.rel (%p238) target = $region48
    $region47: #{_lambda_.1} parent=5 // pred_region
      %s242 = ssub.s32 %s13, 1
      %p243 = scmp.lt.s32.totalorder %s18, 1
      %s244 = scalar_select %p243, %s18, 1
      %s245 = smul.addr %s244, 3
      %s246 = smul.addr %s245, 4
      %s247 = scalar_lea.vmem %s0, %s246
      %p248 = pneg %p39
      %p249 = pneg %p36
      %p250 = pneg %p60
      %p251 = pneg %p57
      %p252 = pneg %p81
      %p253 = pneg %p78
      %p254 = pneg %p102
      %p255 = pneg %p99
      %p256 = pneg %p123
      %p257 = pneg %p120
      %p258 = pneg %p144
      %p259 = pneg %p141
      %p260 = pneg %p165
      %p261 = pneg %p162
      %p262 = pneg %p191
      %p263 = pneg %p188
      %p264 = scmp.lt.s32.totalorder %s18, 1
      %s265 = scalar_select %p264, %s18, 1
      %s266 = smul.addr %s265, 5
      %s267 = smul.addr %s266, 8
      %s268 = scalar_lea.vmem %s7, %s267
      %p269 = scmp.lt.s32.totalorder %s18, 1
      %s270 = scalar_select %p269, %s18, 1
      %s271 = smul.addr %s270, 3
      %s272 = smul.addr %s271, 4
      %s273 = scalar_lea.vmem %s0, %s272
      %p274 = scmp.lt.s32.totalorder %s18, 1
      %s275 = scalar_select %p274, %s18, 1
      %s276 = smul.addr %s275, 5
      %s277 = smul.addr %s276, 8
      %s278 = scalar_lea.vmem %s7, %s277
      %v279 = vld [vmem:[%s273] sm:$0xff]
      %v280 = vld [vmem:[%s273 + $0x8] sm:$0xf]
      %v281 = vld [vmem:[%s1] sm:$0xff]
      %v282 = vld [vmem:[%s1 + $0x8] sm:$0xff]
      %v283 = vld [vmem:[%s1 + $0x10] sm:$0xff]
      %v284 = vld [vmem:[%s1 + $0x18] sm:$0xff]
      %v285 = vld [vmem:[%s1 + $0x20] sm:$0xff]
      %v286 = vld [vmem:[%s1 + $0x28] sm:$0xff]
      %v287 = vld [vmem:[%s1 + $0x30] sm:$0xff]
      %v288 = vld [vmem:[%s1 + $0x38] sm:$0xff]
      %v289 = vld [vmem:[%s1 + $0x40] sm:$0xff]
      %v290 = vld [vmem:[%s1 + $0x48] sm:$0xff]
      %v291 = vld [vmem:[%s1 + $0x50] sm:$0xff]
      %v292 = vld [vmem:[%s1 + $0x58] sm:$0xff]
      %v293 = vld [vmem:[%s1 + $0x60] sm:$0xff]
      %v294 = vld [vmem:[%s1 + $0x68] sm:$0xff]
      %v295 = vld [vmem:[%s1 + $0x70] sm:$0xff]
      %v296 = vld [vmem:[%s1 + $0x78] sm:$0xff]
      %v297 = vld [vmem:[%s1 + $0x80] sm:$0xff]
      %v298 = vld [vmem:[%s1 + $0x88] sm:$0xff]
      %v299 = vld [vmem:[%s1 + $0x90] sm:$0xff]
      %v300 = vld [vmem:[%s1 + $0x98] sm:$0xff]
      %v301 = vld [vmem:[%s1 + $0xa0] sm:$0xff]
      %v302 = vld [vmem:[%s1 + $0xa8] sm:$0xff]
      %v303 = vld [vmem:[%s1 + $0xb0] sm:$0xff]
      %v304 = vld [vmem:[%s1 + $0xb8] sm:$0xff]
      %v305 = vld [vmem:[%s1 + $0xc0] sm:$0xff]
      %v306 = vld [vmem:[%s1 + $0xc8] sm:$0xff]
      %v307 = vld [vmem:[%s1 + $0xd0] sm:$0xff]
      %v308 = vld [vmem:[%s1 + $0xd8] sm:$0xff]
      %v309 = vld [vmem:[%s1 + $0xe0] sm:$0xff]
      %v310 = vld [vmem:[%s1 + $0xe8] sm:$0xff]
      %v311 = vld [vmem:[%s1 + $0xf0] sm:$0xff]
      %v312 = vld [vmem:[%s1 + $0xf8] sm:$0xff]
      %v313 = vld [vmem:[%s1 + $0x100] sm:$0xff]
      %v314 = vld [vmem:[%s1 + $0x108] sm:$0xff]
      %v315 = vld [vmem:[%s1 + $0x110] sm:$0xff]
      %v316 = vld [vmem:[%s1 + $0x118] sm:$0xff]
      %v317 = vld [vmem:[%s2] sm:$0x1]
      %v319 = vlaneseq
      %v320 = vshrl.u32 %v319, 7
      %v321 = vsub.s32 0, %v320
      %v322 = vrot.slane %v317, %v321
      %v326 = vcombine.high %v279, %v279
      %vm328 = vcmask 261120
      %v329 = vsel %vm328, %v280, 0
      %331 = vmatprep.subr.mxu0 0.0
      %332 = vmatpush1.msra.mxu0 %v281
      %333 = vmatprep.subr.mxu0 0.0
      %334 = vmatpush1.msra.mxu0 %v282
      %335 = vmatprep.subr.mxu0 0.0
      %336 = vmatpush1.msra.mxu0 %v283
      %337 = vmatprep.subr.mxu0 0.0
      %338 = vmatpush1.msra.mxu0 %v284
      %339 = vmatprep.subr.mxu0 0.0
      %340 = vmatpush1.msra.mxu0 %v285
      %341 = vmatprep.subr.mxu0 0.0
      %342 = vmatpush1.msra.mxu0 %v286
      %343 = vmatprep.subr.mxu0 0.0
      %344 = vmatpush1.msra.mxu0 %v287
      %345 = vmatprep.subr.mxu0 0.0
      %346 = vmatpush1.msra.mxu0 %v288
      %347 = vmatprep.subr.mxu0 0.0
      %348 = vmatpush1.msra.mxu0 %v289
      %349 = vmatprep.subr.mxu0 0.0
      %350 = vmatpush1.msra.mxu0 %v290
      %351 = vmatprep.subr.mxu0 0.0
      %352 = vmatpush1.msra.mxu0 %v291
      %353 = vmatprep.subr.mxu0 0.0
      %354 = vmatpush1.msra.mxu0 %v292
      %355 = vmatprep.subr.mxu0 0.0
      %356 = vmatpush1.msra.mxu0 %v293
      %357 = vmatprep.subr.mxu0 0.0
      %358 = vmatpush1.msra.mxu0 %v294
      %359 = vmatprep.subr.mxu0 0.0
      %360 = vmatpush1.msra.mxu0 %v295
      %361 = vmatprep.subr.mxu0 0.0
      %362 = vmatpush1.msra.mxu0 %v296
      %363 = vmatprep.subr.mxu0 0.0
      %364 = vmatpush1.msra.mxu0 %v297
      %365 = vmatprep.subr.mxu0 0.0
      %366 = vmatpush1.msra.mxu0 %v298
      %367 = vmatprep.subr.mxu0 0.0
      %368 = vmatpush1.msra.mxu0 %v299
      %369 = vmatprep.subr.mxu0 0.0
      %370 = vmatpush1.msra.mxu0 %v300
      %371 = vmatprep.subr.mxu0 0.0
      %372 = vmatpush1.msra.mxu0 %v301
      %373 = vmatprep.subr.mxu0 0.0
      %374 = vmatpush1.msra.mxu0 %v302
      %375 = vmatprep.subr.mxu0 0.0
      %376 = vmatpush1.msra.mxu0 %v303
      %377 = vmatprep.subr.mxu0 0.0
      %378 = vmatpush1.msra.mxu0 %v304
      %379 = vmatprep.subr.mxu0 0.0
      %380 = vmatpush1.msra.mxu0 %v305
      %381 = vmatprep.subr.mxu0 0.0
      %382 = vmatpush1.msra.mxu0 %v306
      %383 = vmatprep.subr.mxu0 0.0
      %384 = vmatpush1.msra.mxu0 %v307
      %385 = vmatprep.subr.mxu0 0.0
      %386 = vmatpush1.msra.mxu0 %v308
      %387 = vmatprep.subr.mxu0 0.0
      %388 = vmatpush1.msra.mxu0 %v309
      %389 = vmatprep.subr.mxu0 0.0
      %390 = vmatpush1.msra.mxu0 %v310
      %391 = vmatprep.subr.mxu0 0.0
      %392 = vmatpush1.msra.mxu0 %v311
      %393 = vmatprep.subr.mxu0 0.0
      %394 = vmatpush1.msra.mxu0 %v312
      %395 = vmatprep.mubr.f32.mxu0 %v326
      %396 = vmatmul.mubr.f32.gmra.mrb[0].mxu0 %v279
      %v397 = vpop.f32.mrb[0].mxu0
      %v398 = vadd.f32 %v322, %v397
      %v399 = vpop.f32.mrb[0].mxu0
      %400 = vdwg.mxu0
      %401 = vmatprep.subr.mxu0 0.0
      %402 = vmatpush1.msra.mxu0 %v313
      %403 = vmatprep.subr.mxu0 0.0
      %404 = vmatpush1.msra.mxu0 %v314
      %405 = vmatprep.subr.mxu0 0.0
      %406 = vmatpush1.msra.mxu0 %v315
      %407 = vmatprep.subr.mxu0 0.0
      %408 = vmatpush1.msra.mxu0 %v316
      %409 = vmatprep.subr.mxu0 0.0
      %410 = vmatpush1.msra.mxu0 0.0
      %411 = vmatprep.subr.mxu0 0.0
      %412 = vmatpush1.msra.mxu0 0.0
      %413 = vmatprep.subr.mxu0 0.0
      %414 = vmatpush1.msra.mxu0 0.0
      %415 = vmatprep.subr.mxu0 0.0
      %416 = vmatpush1.msra.mxu0 0.0
      %417 = vmatprep.subr.mxu0 0.0
      %418 = vmatpush1.msra.mxu0 0.0
      %419 = vmatprep.subr.mxu0 0.0
      %420 = vmatpush1.msra.mxu0 0.0
      %421 = vmatprep.subr.mxu0 0.0
      %422 = vmatpush1.msra.mxu0 0.0
      %423 = vmatprep.subr.mxu0 0.0
      %424 = vmatpush1.msra.mxu0 0.0
      %425 = vmatprep.subr.mxu0 0.0
      %426 = vmatpush1.msra.mxu0 0.0
      %427 = vmatprep.subr.mxu0 0.0
      %428 = vmatpush1.msra.mxu0 0.0
      %429 = vmatprep.subr.mxu0 0.0
      %430 = vmatpush1.msra.mxu0 0.0
      %431 = vmatprep.subr.mxu0 0.0
      %432 = vmatpush1.msra.mxu0 0.0
      %433 = vmatprep.subr.mxu0 0.0
      %434 = vmatpush1.msra.mxu0 0.0
      %435 = vmatprep.subr.mxu0 0.0
      %436 = vmatpush1.msra.mxu0 0.0
      %437 = vmatprep.subr.mxu0 0.0
      %438 = vmatpush1.msra.mxu0 0.0
      %439 = vmatprep.subr.mxu0 0.0
      %440 = vmatpush1.msra.mxu0 0.0
      %441 = vmatprep.subr.mxu0 0.0
      %442 = vmatpush1.msra.mxu0 0.0
      %443 = vmatprep.subr.mxu0 0.0
      %444 = vmatpush1.msra.mxu0 0.0
      %445 = vmatprep.subr.mxu0 0.0
      %446 = vmatpush1.msra.mxu0 0.0
      %447 = vmatprep.subr.mxu0 0.0
      %448 = vmatpush1.msra.mxu0 0.0
      %449 = vmatprep.subr.mxu0 0.0
      %450 = vmatpush1.msra.mxu0 0.0
      %451 = vmatprep.subr.mxu0 0.0
      %452 = vmatpush1.msra.mxu0 0.0
      %453 = vmatprep.subr.mxu0 0.0
      %454 = vmatpush1.msra.mxu0 0.0
      %455 = vmatprep.subr.mxu0 0.0
      %456 = vmatpush1.msra.mxu0 0.0
      %457 = vmatprep.subr.mxu0 0.0
      %458 = vmatpush1.msra.mxu0 0.0
      %459 = vmatprep.subr.mxu0 0.0
      %460 = vmatpush1.msra.mxu0 0.0
      %461 = vmatprep.subr.mxu0 0.0
      %462 = vmatpush1.msra.mxu0 0.0
      %463 = vmatprep.subr.mxu0 0.0
      %464 = vmatpush1.msra.mxu0 0.0
      %465 = vmatprep.mubr.f32.mxu0 0.0
      %466 = vmatmul.mubr.f32.gmra.mrb[0].mxu0 %v329
      %v467 = vpop.f32.mrb[0].mxu0
      %v468 = vadd.f32 %v398, %v467
      %v469 = vpop.f32.mrb[0].mxu0
      %470 = vdwg.mxu0
      %vm471 = vcmask 27648
      %v472 = vsel %vm471, %v468, -inf
      %473 = vmax.xlane.f32.xlu0 %v472
      %v474 = vpop.xlane.xlu0 %473
      %v475 = vsub.f32 %v468, %v474
      %v476 = vmul.f32 %v475, 1.442695
      %v477 = vpow.pop %v476
      %v478 = vsel %vm471, %v477, 0.0
      %479 = vadd.xlane.f32.xlu0 %v478
      %v480 = vpop.xlane.xlu0 %479
      %v481 = vlog2.pop %v480
      %v482 = vmul.f32 %v481, 0.6931472
      %v483 = vsub.f32 %v475, %v482
      %v484 = vrcp.pop %v480
      %v485 = vmul.f32 %v477, %v484
      %v486 = vmul.f32 %v468, 1.442695
      %v487 = vpow.pop %v486
      %489 = vset.pattern.permute.xlu0 8
      %490 = vperm.xlu0 %489, %v468
      %v491 = vpop.permute.xlu0 %490
      %v493 = vunpack.c.l.s4 839922192
      %v494 = vunpack.c.0.s8 %v493
      %v495 = vlaneseq
      %v496 = vshrl.u32 %v495, 7
      %v497 = vsub.s32 %v494, %v496
      %v498 = vrot.slane %v491, %v497
      %v500 = vsub.f32 %v279, %v498
      %v501 = vsub.f32 %v280, %v498
      %v502 = vsub.f32 0.0, %v468
      %v503 = vmul.f32 %v502, 1.442695
      %v504 = vpow.pop %v503
      %506 = vset.pattern.permute.xlu0 4
      %507 = vperm.xlu0 %506, %v504
      %v508 = vpop.permute.xlu0 %507
      %v510 = vunpack.c.l.s4 839922192
      %v511 = vunpack.c.0.s8 %v510
      %v512 = vlaneseq
      %v513 = vshrl.u32 %v512, 7
      %v514 = vsub.s32 %v511, %v513
      %v515 = vrot.slane %v508, %v514
      %v517 = vmul.f32 %v500, %v515
      %v518 = vmul.f32 %v501, %v515
      %v519 = vsub.f32 %v502, 0.9189385
      %v520 = vmul.f32 %v517, 0.5
      %v521 = vmul.f32 %v518, 0.5
      %v522 = vmul.f32 %v520, %v517
      %v523 = vmul.f32 %v521, %v518
      %525 = vset.pattern.permute.xlu0 4
      %526 = vperm.xlu0 %525, %v519
      %v527 = vpop.permute.xlu0 %526
      %v530 = vcombine.high %v522, %v522
      %v532 = vsub.f32 %v527, %v522
      %v533 = vsub.f32 %v527, %v530
      %v534 = vsub.f32 %v527, %v523
      %536 = vset.pattern.permute.xlu0 0
      %537 = vperm.xlu0 %536, %v483
      %v538 = vpop.permute.xlu0 %537
      %v540 = vadd.f32 %v532, %v538
      %v541 = vadd.f32 %v533, %v538
      %v542 = vadd.f32 %v534, %v538
      %543 = vset.pattern.permute.xlu0 9
      %544 = vperm.xlu0 %543, %v468
      %v545 = vpop.permute.xlu0 %544
      %v547 = vunpack.c.l.s4 839922192
      %v548 = vunpack.c.0.s8 %v547
      %v549 = vlaneseq
      %v550 = vshrl.u32 %v549, 7
      %v551 = vsub.s32 %v548, %v550
      %v552 = vrot.slane %v545, %v551
      %v554 = vsub.f32 %v279, %v552
      %v555 = vsub.f32 %v280, %v552
      %556 = vset.pattern.permute.xlu0 5
      %557 = vperm.xlu0 %556, %v504
      %v558 = vpop.permute.xlu0 %557
      %v560 = vunpack.c.l.s4 839922192
      %v561 = vunpack.c.0.s8 %v560
      %v562 = vlaneseq
      %v563 = vshrl.u32 %v562, 7
      %v564 = vsub.s32 %v561, %v563
      %v565 = vrot.slane %v558, %v564
      %v567 = vmul.f32 %v554, %v565
      %v568 = vmul.f32 %v555, %v565
      %v569 = vmul.f32 %v567, 0.5
      %v570 = vmul.f32 %v568, 0.5
      %v571 = vmul.f32 %v569, %v567
      %v572 = vmul.f32 %v570, %v568
      %573 = vset.pattern.permute.xlu0 5
      %574 = vperm.xlu0 %573, %v519
      %v575 = vpop.permute.xlu0 %574
      %v578 = vcombine.high %v571, %v571
      %v580 = vsub.f32 %v575, %v571
      %v581 = vsub.f32 %v575, %v578
      %v582 = vsub.f32 %v575, %v572
      %583 = vset.pattern.permute.xlu0 1
      %584 = vperm.xlu0 %583, %v483
      %v585 = vpop.permute.xlu0 %584
      %v587 = vadd.f32 %v580, %v585
      %v588 = vadd.f32 %v581, %v585
      %v589 = vadd.f32 %v582, %v585
      %v590 = vmax.f32 %v540, %v587
      %v591 = vmax.f32 %v541, %v588
      %v592 = vmax.f32 %v542, %v589
      %vm593 = vcmp.gt.f32.partialorder %v587, %v540
      %vm594 = vcmp.gt.f32.partialorder %v588, %v541
      %vm595 = vcmp.gt.f32.partialorder %v589, %v542
      %v596 = vsel %vm593, %v587, %v540
      %v597 = vsel %vm594, %v588, %v541
      %v598 = vsel %vm595, %v589, %v542
      %600 = vset.pattern.permute.xlu0 5
      %601 = vperm.xlu0 %600, %v487
      %v602 = vpop.permute.xlu0 %601
      %604 = vset.pattern.permute.xlu0 4
      %605 = vperm.xlu0 %604, %v487
      %v606 = vpop.permute.xlu0 %605
      %v608 = vsel %vm593, %v602, %v606
      %v609 = vsel %vm594, %v602, %v606
      %v610 = vsel %vm595, %v602, %v606
      %611 = vset.pattern.permute.xlu0 10
      %612 = vperm.xlu0 %611, %v468
      %v613 = vpop.permute.xlu0 %612
      %v615 = vunpack.c.l.s4 839922192
      %v616 = vunpack.c.0.s8 %v615
      %v617 = vlaneseq
      %v618 = vshrl.u32 %v617, 7
      %v619 = vsub.s32 %v616, %v618
      %v620 = vrot.slane %v613, %v619
      %v622 = vsub.f32 %v279, %v620
      %v623 = vsub.f32 %v280, %v620
      %624 = vset.pattern.permute.xlu0 6
      %625 = vperm.xlu0 %624, %v504
      %v626 = vpop.permute.xlu0 %625
      %v628 = vunpack.c.l.s4 839922192
      %v629 = vunpack.c.0.s8 %v628
      %v630 = vlaneseq
      %v631 = vshrl.u32 %v630, 7
      %v632 = vsub.s32 %v629, %v631
      %v633 = vrot.slane %v626, %v632
      %v635 = vmul.f32 %v622, %v633
      %v636 = vmul.f32 %v623, %v633
      %v637 = vmul.f32 %v635, 0.5
      %v638 = vmul.f32 %v636, 0.5
      %v639 = vmul.f32 %v637, %v635
      %v640 = vmul.f32 %v638, %v636
      %641 = vset.pattern.permute.xlu0 6
      %642 = vperm.xlu0 %641, %v519
      %v643 = vpop.permute.xlu0 %642
      %v646 = vcombine.high %v639, %v639
      %v648 = vsub.f32 %v643, %v639
      %v649 = vsub.f32 %v643, %v646
      %v650 = vsub.f32 %v643, %v640
      %651 = vset.pattern.permute.xlu0 2
      %652 = vperm.xlu0 %651, %v483
      %v653 = vpop.permute.xlu0 %652
      %v655 = vadd.f32 %v648, %v653
      %v656 = vadd.f32 %v649, %v653
      %v657 = vadd.f32 %v650, %v653
      %v658 = vmax.f32 %v590, %v655
      %v659 = vmax.f32 %v591, %v656
      %v660 = vmax.f32 %v592, %v657
      %vm661 = vcmp.gt.f32.partialorder %v655, %v596
      %vm662 = vcmp.gt.f32.partialorder %v656, %v597
      %vm663 = vcmp.gt.f32.partialorder %v657, %v598
      %v664 = vsel %vm661, %v655, %v596
      %v665 = vsel %vm662, %v656, %v597
      %v666 = vsel %vm663, %v657, %v598
      %667 = vset.pattern.permute.xlu0 6
      %668 = vperm.xlu0 %667, %v487
      %v669 = vpop.permute.xlu0 %668
      %v671 = vsel %vm661, %v669, %v608
      %v672 = vsel %vm662, %v669, %v609
      %v673 = vsel %vm663, %v669, %v610
      %674 = vset.pattern.permute.xlu0 11
      %675 = vperm.xlu0 %674, %v468
      %v676 = vpop.permute.xlu0 %675
      %v678 = vunpack.c.l.s4 839922192
      %v679 = vunpack.c.0.s8 %v678
      %v680 = vlaneseq
      %v681 = vshrl.u32 %v680, 7
      %v682 = vsub.s32 %v679, %v681
      %v683 = vrot.slane %v676, %v682
      %v685 = vsub.f32 %v279, %v683
      %v686 = vsub.f32 %v280, %v683
      %687 = vset.pattern.permute.xlu0 7
      %688 = vperm.xlu0 %687, %v504
      %v689 = vpop.permute.xlu0 %688
      %v691 = vunpack.c.l.s4 839922192
      %v692 = vunpack.c.0.s8 %v691
      %v693 = vlaneseq
      %v694 = vshrl.u32 %v693, 7
      %v695 = vsub.s32 %v692, %v694
      %v696 = vrot.slane %v689, %v695
      %v698 = vmul.f32 %v685, %v696
      %v699 = vmul.f32 %v686, %v696
      %v700 = vmul.f32 %v698, 0.5
      %v701 = vmul.f32 %v699, 0.5
      %v702 = vmul.f32 %v700, %v698
      %v703 = vmul.f32 %v701, %v699
      %704 = vset.pattern.permute.xlu0 7
      %705 = vperm.xlu0 %704, %v519
      %v706 = vpop.permute.xlu0 %705
      %v709 = vcombine.high %v702, %v702
      %v711 = vsub.f32 %v706, %v702
      %v712 = vsub.f32 %v706, %v709
      %v713 = vsub.f32 %v706, %v703
      %714 = vset.pattern.permute.xlu0 3
      %715 = vperm.xlu0 %714, %v483
      %v716 = vpop.permute.xlu0 %715
      %v718 = vadd.f32 %v711, %v716
      %v719 = vadd.f32 %v712, %v716
      %v720 = vadd.f32 %v713, %v716
      %v721 = vmax.f32 %v658, %v718
      %v722 = vmax.f32 %v659, %v719
      %v723 = vmax.f32 %v660, %v720
      %vm724 = vcmp.gt.f32.partialorder %v718, %v664
      %vm725 = vcmp.gt.f32.partialorder %v719, %v665
      %vm726 = vcmp.gt.f32.partialorder %v720, %v666
      %727 = vset.pattern.permute.xlu0 7
      %728 = vperm.xlu0 %727, %v487
      %v729 = vpop.permute.xlu0 %728
      %v731 = vsel %vm724, %v729, %v671
      %v732 = vsel %vm725, %v729, %v672
      %v733 = vsel %vm726, %v729, %v673
      %v736 = vcombine.low %v731, %v732
      %v738 = vsub.f32 %v279, %v736
      %v739 = vsub.f32 %v280, %v733
      %v740 = vadd.f32 %v731, 1e-05
      %v741 = vadd.f32 %v732, 1e-05
      %v742 = vadd.f32 %v733, 1e-05
      %v745 = vcombine.low %v740, %v741
      %v747 = vrcp.pop %v745
      %v748 = vmul.f32 %v738, %v747
      %v749 = vrcp.pop %v742
      %v750 = vmul.f32 %v739, %v749
      %v751 = vsub.f32 %v540, %v721
      %v752 = vsub.f32 %v541, %v722
      %v753 = vsub.f32 %v542, %v723
      %v754 = vmul.f32 %v751, 1.442695
      %v755 = vpow.pop %v754
      %v756 = vmul.f32 %v752, 1.442695
      %v757 = vpow.pop %v756
      %v758 = vmul.f32 %v753, 1.442695
      %v759 = vpow.pop %v758
      %v760 = vmul.f32 %v755, %v532
      %v761 = vmul.f32 %v757, %v533
      %v762 = vmul.f32 %v759, %v534
      %v763 = vsub.f32 %v587, %v721
      %v764 = vsub.f32 %v588, %v722
      %v765 = vsub.f32 %v589, %v723
      %v766 = vmul.f32 %v763, 1.442695
      %v767 = vpow.pop %v766
      %v768 = vmul.f32 %v764, 1.442695
      %v769 = vpow.pop %v768
      %v770 = vmul.f32 %v765, 1.442695
      %v771 = vpow.pop %v770
      %v772 = vmul.f32 %v767, %v580
      %v773 = vmul.f32 %v769, %v581
      %v774 = vmul.f32 %v771, %v582
      %v775 = vadd.f32 %v755, %v767
      %v776 = vadd.f32 %v757, %v769
      %v777 = vadd.f32 %v759, %v771
      %v778 = vadd.f32 %v760, %v772
      %v779 = vadd.f32 %v761, %v773
      %v780 = vadd.f32 %v762, %v774
      %v781 = vsub.f32 %v655, %v721
      %v782 = vsub.f32 %v656, %v722
      %v783 = vsub.f32 %v657, %v723
      %v784 = vmul.f32 %v781, 1.442695
      %v785 = vpow.pop %v784
      %v786 = vmul.f32 %v782, 1.442695
      %v787 = vpow.pop %v786
      %v788 = vmul.f32 %v783, 1.442695
      %v789 = vpow.pop %v788
      %v790 = vmul.f32 %v785, %v648
      %v791 = vmul.f32 %v787, %v649
      %v792 = vmul.f32 %v789, %v650
      %v793 = vadd.f32 %v775, %v785
      %v794 = vadd.f32 %v776, %v787
      %v795 = vadd.f32 %v777, %v789
      %v796 = vadd.f32 %v778, %v790
      %v797 = vadd.f32 %v779, %v791
      %v798 = vadd.f32 %v780, %v792
      %v799 = vsub.f32 %v718, %v721
      %v800 = vsub.f32 %v719, %v722
      %v801 = vsub.f32 %v720, %v723
      %v802 = vmul.f32 %v799, 1.442695
      %v803 = vpow.pop %v802
      %v804 = vmul.f32 %v800, 1.442695
      %v805 = vpow.pop %v804
      %v806 = vmul.f32 %v801, 1.442695
      %v807 = vpow.pop %v806
      %v808 = vmul.f32 %v803, %v711
      %v809 = vmul.f32 %v805, %v712
      %v810 = vmul.f32 %v807, %v713
      %v811 = vadd.f32 %v793, %v803
      %v812 = vadd.f32 %v794, %v805
      %v813 = vadd.f32 %v795, %v807
      %v814 = vadd.f32 %v796, %v808
      %v815 = vadd.f32 %v797, %v809
      %v816 = vadd.f32 %v798, %v810
      %v817 = vrcp.pop %v811
      %v818 = vrcp.pop %v812
      %v819 = vrcp.pop %v813
      %v820 = vlog2.pop %v811
      %v821 = vmul.f32 %v820, 0.6931472
      %v822 = vlog2.pop %v812
      %v823 = vmul.f32 %v822, 0.6931472
      %v824 = vlog2.pop %v813
      %v825 = vmul.f32 %v824, 0.6931472
      %v826 = vadd.f32 %v721, %v821
      %v827 = vadd.f32 %v722, %v823
      %v828 = vadd.f32 %v723, %v825
      %v829 = vmul.f32 %v814, %v817
      %v830 = vmul.f32 %v815, %v818
      %v831 = vmul.f32 %v816, %v819
      %vm832 = vcmask 1043456
      %v833 = vsel %vm832, %v829, 0.0
      %v834 = vsel %vm832, %v830, 0.0
      %v835 = vadd.f32 %v833, %v834
      %vm836 = vcmask 257024
      %v837 = vsel %vm836, %v831, 0.0
      %v838 = vadd.f32 %v835, %v837
      %839 = vadd.xlane.f32.xlu0 %v838
      %v840 = vpop.xlane.xlu0 %839
      %v841 = vsel %vm832, %v826, 0.0
      %v842 = vsel %vm832, %v827, 0.0
      %v843 = vadd.f32 %v841, %v842
      %v844 = vsel %vm836, %v828, 0.0
      %v845 = vadd.f32 %v843, %v844
      %846 = vadd.xlane.f32.xlu0 %v845
      %v847 = vpop.xlane.xlu0 %846
      %v848 = vmul.f32 %v847, 0.0034722222
      %v849 = vsel %vm832, %v540, 0.0
      %v850 = vsel %vm832, %v541, 0.0
      %v851 = vadd.f32 %v849, %v850
      %v852 = vsel %vm836, %v542, 0.0
      %v853 = vadd.f32 %v851, %v852
      %854 = vadd.xlane.f32.xlu0 %v853
      %v855 = vpop.xlane.xlu0 %854
      %v856 = vmul.f32 %v855, 0.0034722222
      %v857 = vsub.f32 %v856, %v848
      %v858 = vsub.f32 %v483, %v857
      %v859 = vmul.f32 %v485, %v858
      %v860 = vsel %vm832, %v587, 0.0
      %v861 = vsel %vm832, %v588, 0.0
      %v862 = vadd.f32 %v860, %v861
      %v863 = vsel %vm836, %v589, 0.0
      %v864 = vadd.f32 %v862, %v863
      %865 = vadd.xlane.f32.xlu0 %v864
      %v866 = vpop.xlane.xlu0 %865
      %v867 = vmul.f32 %v866, 0.0034722222
      %v868 = vsub.f32 %v867, %v848
      %v869 = vsub.f32 %v483, %v868
      %v870 = vmul.f32 %v485, %v869
      %872 = vrot.lane.b32.xlu0 %v870, 127
      %v873 = vpop.permute.xlu0 %872
      %v875 = vadd.f32 %v859, %v873
      %v876 = vsel %vm832, %v655, 0.0
      %v877 = vsel %vm832, %v656, 0.0
      %v878 = vadd.f32 %v876, %v877
      %v879 = vsel %vm836, %v657, 0.0
      %v880 = vadd.f32 %v878, %v879
      %881 = vadd.xlane.f32.xlu0 %v880
      %v882 = vpop.xlane.xlu0 %881
      %v883 = vmul.f32 %v882, 0.0034722222
      %v884 = vsub.f32 %v883, %v848
      %v885 = vsub.f32 %v483, %v884
      %v886 = vmul.f32 %v485, %v885
      %888 = vrot.lane.b32.xlu0 %v886, 126
      %v889 = vpop.permute.xlu0 %888
      %v891 = vadd.f32 %v875, %v889
      %v892 = vsel %vm832, %v718, 0.0
      %v893 = vsel %vm832, %v719, 0.0
      %v894 = vadd.f32 %v892, %v893
      %v895 = vsel %vm836, %v720, 0.0
      %v896 = vadd.f32 %v894, %v895
      %897 = vadd.xlane.f32.xlu0 %v896
      %v898 = vpop.xlane.xlu0 %897
      %v899 = vmul.f32 %v898, 0.0034722222
      %v900 = vsub.f32 %v899, %v848
      %v901 = vsub.f32 %v483, %v900
      %v902 = vmul.f32 %v485, %v901
      %904 = vrot.lane.b32.xlu0 %v902, 125
      %v905 = vpop.permute.xlu0 %904
      %v907 = vadd.f32 %v891, %v905
      %v908 = vcombine.low %v279, %v279
      %911 = vrot.lane.b32.xlu0 %v748, 112
      %v912 = vpop.permute.xlu0 %911
      %914 = vrot.lane.b32.xlu0 %v908, 112
      %v915 = vpop.permute.xlu0 %914
      %v917 = vcombine.high %v748, %v748
      %918 = vrot.lane.b32.xlu0 %v748, 32
      %v919 = vpop.permute.xlu0 %918
      %920 = vrot.lane.b32.xlu0 %v917, 32
      %v921 = vpop.permute.xlu0 %920
      %v922 = vsel %vm328, %v919, %v921
      %924 = vrot.lane.b32.xlu0 %v908, 32
      %v925 = vpop.permute.xlu0 %924
      %926 = vrot.lane.b32.xlu0 %v279, 32
      %v927 = vpop.permute.xlu0 %926
      %v928 = vsel %vm328, %v925, %v927
      %930 = vrot.lane.b32.xlu0 %v748, 16
      %v931 = vpop.permute.xlu0 %930
      %932 = vrot.lane.b32.xlu0 %v917, 16
      %v933 = vpop.permute.xlu0 %932
      %vm934 = vcmask 130048
      %v935 = vsel %vm934, %v931, %v933
      %937 = vrot.lane.b32.xlu0 %v908, 16
      %v938 = vpop.permute.xlu0 %937
      %939 = vrot.lane.b32.xlu0 %v279, 16
      %v940 = vpop.permute.xlu0 %939
      %v941 = vsel %vm934, %v938, %v940
      %944 = vrot.lane.b32.xlu0 %v917, 64
      %v945 = vpop.permute.xlu0 %944
      %946 = vrot.lane.b32.xlu0 %v750, 64
      %v947 = vpop.permute.xlu0 %946
      %vm948 = vcmask 523264
      %v949 = vsel %vm948, %v945, %v947
      %v951 = vcombine.low %v280, %v280
      %952 = vrot.lane.b32.xlu0 %v279, 64
      %v953 = vpop.permute.xlu0 %952
      %954 = vrot.lane.b32.xlu0 %v951, 64
      %v955 = vpop.permute.xlu0 %954
      %v956 = vsel %vm948, %v953, %v955
      %958 = vrot.lane.b32.xlu0 %v917, 48
      %v959 = vpop.permute.xlu0 %958
      %960 = vrot.lane.b32.xlu0 %v750, 48
      %v961 = vpop.permute.xlu0 %960
      %vm962 = vcmask 392192
      %v963 = vsel %vm962, %v959, %v961
      %965 = vrot.lane.b32.xlu0 %v279, 48
      %v966 = vpop.permute.xlu0 %965
      %967 = vrot.lane.b32.xlu0 %v951, 48
      %v968 = vpop.permute.xlu0 %967
      %v969 = vsel %vm962, %v966, %v968
      %v971 = vsel %vm832, %v748, %v908
      %v972 = vsel %vm832, %v912, %v915
      %v973 = vsel %vm832, %v922, %v928
      %v974 = vsel %vm832, %v935, %v941
      %v975 = vsel %vm832, %v949, %v956
      %v976 = vsel %vm832, %v963, %v969
      %v977 = vld [vmem:[%s3] sm:$0xff]
      %v978 = vld [vmem:[%s3 + $0x8] sm:$0xff]
      %v979 = vld [vmem:[%s3 + $0x10] sm:$0xff]
      %v980 = vld [vmem:[%s4] sm:$0xff]
      %v981 = vld [vmem:[%s4 + $0x8] sm:$0xff]
      %v982 = vld [vmem:[%s4 + $0x10] sm:$0xff]
      %984 = vset.pattern.permute.xlu0 0
      %985 = vperm.xlu0 %984, %v980
      %v986 = vpop.permute.xlu0 %985
      %989 = vset.pattern.permute.xlu0 0
      %990 = vperm.xlu0 %989, %v981
      %v991 = vpop.permute.xlu0 %990
      %994 = vset.pattern.permute.xlu0 0
      %995 = vperm.xlu0 %994, %v982
      %v996 = vpop.permute.xlu0 %995
      %v999 = vsel %vm962, %v977, 0
      %v1002 = vsel %vm962, %v978, 0
      %v1005 = vsel %vm962, %v979, 0
      %1007 = vmatprep.subr.mxu0 0.0
      %1008 = vmatpush1.msra.mxu0 %v971
      %1009 = vmatprep.subr.mxu0 0.0
      %1010 = vmatpush1.msra.mxu0 %v972
      %1011 = vmatprep.subr.mxu0 0.0
      %1012 = vmatpush1.msra.mxu0 %v973
      %1013 = vmatprep.subr.mxu0 0.0
      %1014 = vmatpush1.msra.mxu0 %v974
      %1015 = vmatprep.subr.mxu0 0.0
      %1016 = vmatpush1.msra.mxu0 %v975
      %1017 = vmatprep.subr.mxu0 0.0
      %1018 = vmatpush1.msra.mxu0 %v976
      %1019 = vmatprep.subr.mxu0 0.0
      %1020 = vmatpush1.msra.mxu0 0.0
      %1021 = vmatprep.subr.mxu0 0.0
      %1022 = vmatpush1.msra.mxu0 0.0
      %1023 = vmatprep.subr.mxu0 0.0
      %1024 = vmatpush1.msra.mxu0 0.0
      %1025 = vmatprep.subr.mxu0 0.0
      %1026 = vmatpush1.msra.mxu0 0.0
      %1027 = vmatprep.subr.mxu0 0.0
      %1028 = vmatpush1.msra.mxu0 0.0
      %1029 = vmatprep.subr.mxu0 0.0
      %1030 = vmatpush1.msra.mxu0 0.0
      %1031 = vmatprep.subr.mxu0 0.0
      %1032 = vmatpush1.msra.mxu0 0.0
      %1033 = vmatprep.subr.mxu0 0.0
      %1034 = vmatpush1.msra.mxu0 0.0
      %1035 = vmatprep.subr.mxu0 0.0
      %1036 = vmatpush1.msra.mxu0 0.0
      %1037 = vmatprep.subr.mxu0 0.0
      %1038 = vmatpush1.msra.mxu0 0.0
      %1039 = vmatprep.subr.mxu0 0.0
      %1040 = vmatpush1.msra.mxu0 0.0
      %1041 = vmatprep.subr.mxu0 0.0
      %1042 = vmatpush1.msra.mxu0 0.0
      %1043 = vmatprep.subr.mxu0 0.0
      %1044 = vmatpush1.msra.mxu0 0.0
      %1045 = vmatprep.subr.mxu0 0.0
      %1046 = vmatpush1.msra.mxu0 0.0
      %1047 = vmatprep.subr.mxu0 0.0
      %1048 = vmatpush1.msra.mxu0 0.0
      %1049 = vmatprep.subr.mxu0 0.0
      %1050 = vmatpush1.msra.mxu0 0.0
      %1051 = vmatprep.subr.mxu0 0.0
      %1052 = vmatpush1.msra.mxu0 0.0
      %1053 = vmatprep.subr.mxu0 0.0
      %1054 = vmatpush1.msra.mxu0 0.0
      %1055 = vmatprep.subr.mxu0 0.0
      %1056 = vmatpush1.msra.mxu0 0.0
      %1057 = vmatprep.subr.mxu0 0.0
      %1058 = vmatpush1.msra.mxu0 0.0
      %1059 = vmatprep.subr.mxu0 0.0
      %1060 = vmatpush1.msra.mxu0 0.0
      %1061 = vmatprep.subr.mxu0 0.0
      %1062 = vmatpush1.msra.mxu0 0.0
      %1063 = vmatprep.subr.mxu0 0.0
      %1064 = vmatpush1.msra.mxu0 0.0
      %1065 = vmatprep.subr.mxu0 0.0
      %1066 = vmatpush1.msra.mxu0 0.0
      %1067 = vmatprep.subr.mxu0 0.0
      %1068 = vmatpush1.msra.mxu0 0.0
      %1069 = vmatprep.subr.mxu0 0.0
      %1070 = vmatpush1.msra.mxu0 0.0
      %1071 = vmatprep.mubr.f32.mxu0 0.0
      %1072 = vmatmul.mubr.f32.gmra.mrb[0].mxu0 %v999
      %v1073 = vpop.f32.mrb[0].mxu0
      %v1074 = vadd.f32 %v986, %v1073
      %v1075 = vpop.f32.mrb[0].mxu0
      %1076 = vmatprep.mubr.f32.mxu0 0.0
      %1077 = vmatmul.mubr.f32.gmra.mrb[0].mxu0 %v1002
      %v1078 = vpop.f32.mrb[0].mxu0
      %v1079 = vadd.f32 %v991, %v1078
      %v1080 = vpop.f32.mrb[0].mxu0
      %1081 = vmatprep.mubr.f32.mxu0 0.0
      %1082 = vmatmul.mubr.f32.gmra.mrb[0].mxu0 %v1005
      %v1083 = vpop.f32.mrb[0].mxu0
      %v1084 = vadd.f32 %v996, %v1083
      %v1085 = vpop.f32.mrb[0].mxu0
      %1086 = vdwg.mxu0
      %v1087 = vtanh.pop %v1074
      %v1088 = vtanh.pop %v1079
      %v1089 = vxor.u32 %v1079, 2147483648
      %v1090 = vxor.u32 %v1084, 2147483648
      %v1091 = vmul.f32 %v1089, 1.442695
      %v1092 = vpow.pop %v1091
      %v1093 = vmul.f32 %v1090, 1.442695
      %v1094 = vpow.pop %v1093
      %v1095 = vadd.f32 %v1092, 1.0
      %v1096 = vadd.f32 %v1094, 1.0
      %v1097 = vrcp.pop %v1095
      %v1098 = vmul.f32 1.0, %v1097
      %v1099 = vrcp.pop %v1096
      %v1100 = vmul.f32 1.0, %v1099
      %v1103 = vrot.slane %v1098, 4
      %v1104 = vrot.slane %v1100, 4
      %v1105 = vsel %vm832, %v1103, %v1104
      %v1108 = vmul.f32 %v1087, %v1105
      %v1109 = vmul.f32 %v1088, %v1104
      %v1110 = vld [vmem:[%s5] sm:$0xff]
      %v1111 = vld [vmem:[%s5 + $0x8] sm:$0xff]
      %v1112 = vld [vmem:[%s5 + $0x10] sm:$0xff]
      %v1113 = vld [vmem:[%s6] sm:$0xff]
      %v1114 = vld [vmem:[%s6 + $0x8] sm:$0xff]
      %v1115 = vld [vmem:[%s6 + $0x10] sm:$0xff]
      %1117 = vset.pattern.permute.xlu0 0
      %1118 = vperm.xlu0 %1117, %v1113
      %v1119 = vpop.permute.xlu0 %1118
      %1122 = vset.pattern.permute.xlu0 0
      %1123 = vperm.xlu0 %1122, %v1114
      %v1124 = vpop.permute.xlu0 %1123
      %1127 = vset.pattern.permute.xlu0 0
      %1128 = vperm.xlu0 %1127, %v1115
      %v1129 = vpop.permute.xlu0 %1128
      %vm1131 = vcmask 97280
      %v1133 = vsel %vm1131, %v1110, 0
      %v1136 = vsel %vm1131, %v1111, 0
      %v1139 = vsel %vm1131, %v1112, 0
      %v1142 = vsel %vm832, %v1109, 0
      %1144 = vmatprep.subr.mxu0 0.0
      %1145 = vmatpush1.msra.mxu0 %v1108
      %1146 = vmatprep.subr.mxu0 0.0
      %1147 = vmatpush1.msra.mxu0 %v1142
      %1148 = vmatprep.subr.mxu0 0.0
      %1149 = vmatpush1.msra.mxu0 0.0
      %1150 = vmatprep.subr.mxu0 0.0
      %1151 = vmatpush1.msra.mxu0 0.0
      %1152 = vmatprep.subr.mxu0 0.0
      %1153 = vmatpush1.msra.mxu0 0.0
      %1154 = vmatprep.subr.mxu0 0.0
      %1155 = vmatpush1.msra.mxu0 0.0
      %1156 = vmatprep.subr.mxu0 0.0
      %1157 = vmatpush1.msra.mxu0 0.0
      %1158 = vmatprep.subr.mxu0 0.0
      %1159 = vmatpush1.msra.mxu0 0.0
      %1160 = vmatprep.subr.mxu0 0.0
      %1161 = vmatpush1.msra.mxu0 0.0
      %1162 = vmatprep.subr.mxu0 0.0
      %1163 = vmatpush1.msra.mxu0 0.0
      %1164 = vmatprep.subr.mxu0 0.0
      %1165 = vmatpush1.msra.mxu0 0.0
      %1166 = vmatprep.subr.mxu0 0.0
      %1167 = vmatpush1.msra.mxu0 0.0
      %1168 = vmatprep.subr.mxu0 0.0
      %1169 = vmatpush1.msra.mxu0 0.0
      %1170 = vmatprep.subr.mxu0 0.0
      %1171 = vmatpush1.msra.mxu0 0.0
      %1172 = vmatprep.subr.mxu0 0.0
      %1173 = vmatpush1.msra.mxu0 0.0
      %1174 = vmatprep.subr.mxu0 0.0
      %1175 = vmatpush1.msra.mxu0 0.0
      %1176 = vmatprep.subr.mxu0 0.0
      %1177 = vmatpush1.msra.mxu0 0.0
      %1178 = vmatprep.subr.mxu0 0.0
      %1179 = vmatpush1.msra.mxu0 0.0
      %1180 = vmatprep.subr.mxu0 0.0
      %1181 = vmatpush1.msra.mxu0 0.0
      %1182 = vmatprep.subr.mxu0 0.0
      %1183 = vmatpush1.msra.mxu0 0.0
      %1184 = vmatprep.subr.mxu0 0.0
      %1185 = vmatpush1.msra.mxu0 0.0
      %1186 = vmatprep.subr.mxu0 0.0
      %1187 = vmatpush1.msra.mxu0 0.0
      %1188 = vmatprep.subr.mxu0 0.0
      %1189 = vmatpush1.msra.mxu0 0.0
      %1190 = vmatprep.subr.mxu0 0.0
      %1191 = vmatpush1.msra.mxu0 0.0
      %1192 = vmatprep.subr.mxu0 0.0
      %1193 = vmatpush1.msra.mxu0 0.0
      %1194 = vmatprep.subr.mxu0 0.0
      %1195 = vmatpush1.msra.mxu0 0.0
      %1196 = vmatprep.subr.mxu0 0.0
      %1197 = vmatpush1.msra.mxu0 0.0
      %1198 = vmatprep.subr.mxu0 0.0
      %1199 = vmatpush1.msra.mxu0 0.0
      %1200 = vmatprep.subr.mxu0 0.0
      %1201 = vmatpush1.msra.mxu0 0.0
      %1202 = vmatprep.subr.mxu0 0.0
      %1203 = vmatpush1.msra.mxu0 0.0
      %1204 = vmatprep.subr.mxu0 0.0
      %1205 = vmatpush1.msra.mxu0 0.0
      %1206 = vmatprep.subr.mxu0 0.0
      %1207 = vmatpush1.msra.mxu0 0.0
      %1208 = vmatprep.mubr.f32.mxu0 0.0
      %1209 = vmatmul.mubr.f32.gmra.mrb[0].mxu0 %v1133
      %v1210 = vpop.f32.mrb[0].mxu0
      %v1211 = vadd.f32 %v1119, %v1210
      %v1212 = vpop.f32.mrb[0].mxu0
      %1213 = vmatprep.mubr.f32.mxu0 0.0
      %1214 = vmatmul.mubr.f32.gmra.mrb[0].mxu0 %v1136
      %v1215 = vpop.f32.mrb[0].mxu0
      %v1216 = vadd.f32 %v1124, %v1215
      %v1217 = vpop.f32.mrb[0].mxu0
      %1218 = vmatprep.mubr.f32.mxu0 0.0
      %1219 = vmatmul.mubr.f32.gmra.mrb[0].mxu0 %v1139
      %v1220 = vpop.f32.mrb[0].mxu0
      %v1221 = vadd.f32 %v1129, %v1220
      %v1222 = vpop.f32.mrb[0].mxu0
      %1223 = vdwg.mxu0
      %v1226 = vrot.slane %v1216, 4
      %v1227 = vrot.slane %v1221, 4
      %v1228 = vsel %vm832, %v1226, %v1227
      %v1232 = vrot.slane %v1211, 4
      %v1233 = vsel %vm832, %v1232, %v1226
      %v1236 = vsel %vm832, %v1227, %v1232
      %1238 = vrot.lane.b32.xlu0 %v907, 1
      %v1239 = vpop.permute.xlu0 %1238
      %vm1241 = vcmask 7168
      %v1242 = vsel %vm1241, %v840, %v1239
      %vm1243 = vcmask 15360
      %v1244 = vsel %vm1243, %v1242, 0.0
      %v1245 = vsel %vm832, %v1244, 0.0
      %1248 = vrot.lane.b32.xlu0 %v1245, 80
      %v1249 = vpop.permute.xlu0 %1248
      %1250 = vrot.lane.b32.xlu0 0.0, 80
      %v1251 = vpop.permute.xlu0 %1250
      %vm1254 = vcmask 654336
      %v1255 = vsel %vm1254, %v1228, %v1249
      %v1256 = vsel %vm1254, %v1236, %v1251
      %v1257 = vsel %vm1254, %v1233, %v1251
      %v1258 = vsel %vm1254, %v1105, %v1251
      %v1259 = vsel %vm1254, %v1104, %v1251
      %1260 = vst [vmem:[%s278] sm:$0xff] %v1255
      %1261 = vst [vmem:[%s278 + $0x8] sm:$0xff] %v1256
      %1262 = vst [vmem:[%s278 + $0x10] sm:$0xff] %v1257
      %1263 = vst [vmem:[%s278 + $0x18] sm:$0xff] %v1258
      %1264 = vst [vmem:[%s278 + $0x20] sm:$0xf] %v1259
      %p1265 = scmp.lt.s32.totalorder %s18, 1
      %s1266 = scalar_select %p1265, %s18, 1
      %s1267 = smul.addr %s1266, 5
      %s1268 = smul.addr %s1267, 8
      %s1269 = scalar_lea.vmem %s7, %s1268
      // Predicated region
      $region49: #{_lambda_.1} parent=47 // pred_check
        %p1270 = pneg %p188
      $region50: #{_lambda_.1} parent=47 // pred_check_branch
        %1272 = sbr.rel (%p1270) target = $region52
      $region51: #{_lambda_.1} parent=47 // pred_region
        _
      $region52: #{_lambda_.1} parent=47 // pred_fallthru
        _
    $region48: #{_lambda_.1} parent=5 // pred_fallthru
      _
    %p1273 = scmp.le.s32.totalorder 2, %s13
    // Predicated region
    $region53: #{_lambda_.1} parent=5 // pred_check
      %p1274 = pneg %p1273
    $region54: #{_lambda_.1} parent=5 // pred_check_branch
      %1276 = sbr.rel (%p1274) target = $region56
    $region55: #{_lambda_.1} parent=5 // pred_region
      %s1277 = ssub.s32 %s13, 2
      // Predicated region
      $region57: #{_lambda_.1} parent=55 // pred_check
        %p1278 = pneg %p194
      $region58: #{_lambda_.1} parent=55 // pred_check_branch
        %1280 = sbr.rel (%p1278) target = $region60
      $region59: #{_lambda_.1} parent=55 // pred_region
        %p1281 = scmp.lt.s32.totalorder %s19, 1
        %s1282 = scalar_select %p1281, %s19, 1
        %s1283 = smul.addr %s1282, 5
        %s1284 = smul.addr %s1283, 8
        %s1285 = scalar_lea.vmem %s7, %s1284
      $region60: #{_lambda_.1} parent=55 // pred_fallthru
        _
    $region56: #{_lambda_.1} parent=5 // pred_fallthru
      _
  $region6: #{_lambda_.1} parent=0 // loop_footer
    %s17 = sadd.s32 1, %s13
  $region7: #{_lambda_.1} parent=0 // loop_footer_branch
    %12 = sbr.rel target = $region3
  $region8: #{_lambda_.1} parent=0 // loop_exit
    _

</llo_original>
